<compile_context>
chip_gen: v7x
topology: tpu7x:2x2x1
jax: 0.10.0
libtpu: 0.0.40
codegen_flags: <defaults>
</compile_context>

<pallas_src>
import jax
import jax.numpy as jnp
from jax.experimental import pallas as pl
from jax.experimental.pallas import tpu as pltpu

# ---- model hyper-params (small, consistent with the PyTorch module) ----
D = 32            # model_dim
NHEAD = 2
DH = D // NHEAD   # head dim
FF = 2 * D        # dim_feedforward
CHAMP_VOCAB = 16  # stand-in for len(CHAMPION_STOI)
ITEM_VOCAB = 32   # stand-in for len(ITEMS_AUGMENTS_STOI)
LN_EPS = 1e-5
NEG = -1e30
OUT_PAD = 128     # lane-dense output width (real logits are the first 3 cols)

# row offsets inside the packed weight matrix (128 lanes wide, bf16)
W_IN_R = 0          # (D, 3D)              rows   0: 32   (Q cols pre-scaled)
W_OUT_R = 32        # (D, D)               rows  32: 64
W1_R = 64           # (D, FF)              rows  64: 96
W2_R = 96           # (FF -> 128 rows, D)  rows  96:224   (rows FF..127 zero)
PW1_R = 224         # (3D, D)              rows 224:320
PW2_R = 320         # (D -> 128 rows, 3)   rows 320:448   (rows D..127 zero)
W_ROWS = 448
# row offsets inside the packed vector array (each row = one bias/gain, f32)
(LN1G_R, LN1B_R, LN2G_R, LN2B_R, BIN_R, BOUT_R, B1_R, B2_R, PB1_R, PB2_R) = range(10)
V_ROWS = 10


def _round_up(x, m):
    return ((x + m - 1) // m) * m


def _group_size(S):
    """Boards per dense attention block: largest pow2 <= 16 with G*S <= 128."""
    g = 1
    while g * 2 <= 16 and g * 2 * S <= 128:
        g *= 2
    return g


# ---------------- fused Pallas kernel ----------------
def fused_kernel(x_ref, bias_ref, bd_ref, w_ref, v_ref, out_ref):
    """Encoder layer + mean-pool + prediction head for TB board-pairs."""
    xt = x_ref[...]                               # (2, TB, S, D) bf16
    TB, S = xt.shape[1], xt.shape[2]
    TB2 = 2 * TB
    N = TB2 * S
    GS = bd_ref.shape[0]                          # G*S lanes per dense attention block
    NG = N // GS                                  # dense blocks per grid step

    x = xt.reshape(N, D).astype(jnp.float32)

    # ---- parameters (static slices of the packed VMEM refs) ----
    ln1_g = v_ref[LN1G_R:LN1G_R + 1, :D]
    ln1_b = v_ref[LN1B_R:LN1B_R + 1, :D]
    ln2_g = v_ref[LN2G_R:LN2G_R + 1, :D]
    ln2_b = v_ref[LN2B_R:LN2B_R + 1, :D]
    b_in  = v_ref[BIN_R:BIN_R + 1, :]             # (1,128) f32, Q part pre-scaled
    b_out = v_ref[BOUT_R:BOUT_R + 1, :]
    b1    = v_ref[B1_R:B1_R + 1, :]
    b2    = v_ref[B2_R:B2_R + 1, :]
    pb1   = v_ref[PB1_R:PB1_R + 1, :]
    pb2   = v_ref[PB2_R:PB2_R + 1, :]

    w_in = w_ref[W_IN_R:W_IN_R + D, :]            # (32,128) bf16, full lane width
    w1   = w_ref[W1_R:W1_R + D, :]                # (32,128)
    w2   = w_ref[W2_R:W2_R + 128, :]              # (128,128), rows FF..127 zero
    pw1  = w_ref[PW1_R:PW1_R + 3 * D, :]          # (96,128)
    pw2  = w_ref[PW2_R:PW2_R + 128, :]            # (128,128), rows D..127 zero

    def layer_norm(v, g, b):
        mu = jnp.mean(v, axis=-1, keepdims=True)
        var = jnp.mean(jnp.square(v - mu), axis=-1, keepdims=True)
        return (v - mu) * jax.lax.rsqrt(var + LN_EPS) * g + b

    # ---- self-attention (norm_first), grouped dense block-diagonal scores ----
    xn = layer_norm(x, ln1_g, ln1_b)
    qkv = jnp.dot(xn.astype(jnp.bfloat16), w_in,
                  preferred_element_type=jnp.float32) + b_in            # (N,128)

    # additive bias: key-padding (per board/key, lane-dense GS) + block-diag mask
    abias = bias_ref[...].reshape(NG, 1, GS) + bd_ref[...].reshape(1, GS, GS)

    attn = b_out                                                        # (1,128) f32
    for h in range(NHEAD):                        # static unroll, NHEAD = 2
        qh = qkv[:, h * DH:(h + 1) * DH].reshape(NG, GS, DH).astype(jnp.bfloat16)
        kh = qkv[:, D + h * DH:D + (h + 1) * DH].reshape(NG, GS, DH).astype(jnp.bfloat16)
        vh = qkv[:, 2 * D + h * DH:2 * D + (h + 1) * DH].reshape(NG, GS, DH).astype(jnp.bfloat16)
        # dense (GS x GS) scores per group; scale already folded into Q weights
        s = jnp.einsum('gqd,gkd->gqk', qh, kh,
                       preferred_element_type=jnp.float32) + abias      # (NG,GS,GS) f32
        s = s - jnp.max(s, axis=-1, keepdims=True)
        p = jnp.exp(s)
        # every row has at least its own board's CLS key unmasked -> denom >= 1
        p = (p * pl.reciprocal(jnp.sum(p, axis=-1, keepdims=True), approx=True)
             ).astype(jnp.bfloat16)
        ctx = jnp.einsum('gqk,gkd->gqd', p, vh,
                         preferred_element_type=jnp.float32)            # (NG,GS,DH)
        # no lane concat: sum per-head matmuls against sublane slices of W_out
        wo_h = w_ref[W_OUT_R + h * DH:W_OUT_R + (h + 1) * DH, :]        # (DH,128) bf16
        attn = attn + jnp.dot(ctx.reshape(N, DH).astype(jnp.bfloat16), wo_h,
                              preferred_element_type=jnp.float32)
    x1 = x + attn[:, :D]

    # ---- feed-forward block (norm_first) ----
    xn2 = layer_norm(x1, ln2_g, ln2_b)
    hid = jnp.maximum(jnp.dot(xn2.astype(jnp.bfloat16), w1,
                              preferred_element_type=jnp.float32) + b1, 0.0)   # (N,128)
    ffn = jnp.dot(hid.astype(jnp.bfloat16), w2,
                  preferred_element_type=jnp.float32) + b2                     # (N,128)
    x2 = x1 + ffn[:, :D]

    # ---- mean-pool over the sequence (includes padded positions, as torch.mean) ----
    pooled = jnp.sum(x2.reshape(TB2, S, D), axis=1) * (1.0 / S)                # (TB2,D)
    pooled2 = pooled.reshape(2, TB, D)
    b1e, b2e = pooled2[0], pooled2[1]

    # ---- fused prediction MLP (full 128-lane weights; padded cols/rows are zero) ----
    board = jnp.concatenate([b1e, b2e, b1e - b2e], axis=-1).astype(jnp.bfloat16)  # (TB,96)
    h1 = jnp.maximum(jnp.dot(board, pw1, preferred_element_type=jnp.float32) + pb1, 0.0)
    out_ref[...] = jnp.dot(h1.astype(jnp.bfloat16), pw2,
                           preferred_element_type=jnp.float32) + pb2           # (TB,128)


# ---------------- parameter packing (one-time, host-side) ----------------
def pack_params(P):
    scale = 1.0 / (DH ** 0.5)

    def pad_rc(a, rows):
        return jnp.pad(a, ((0, rows - a.shape[0]), (0, 128 - a.shape[1])))

    w_in = P['w_in'].at[:, :D].multiply(scale)      # fold 1/sqrt(dh) into Q projection
    wpack = jnp.concatenate([
        pad_rc(w_in, D),            # rows   0: 32
        pad_rc(P['w_out'], D),      # rows  32: 64
        pad_rc(P['w1'], D),         # rows  64: 96
        pad_rc(P['w2'], 128),       # rows  96:224  (rows FF..127 zero)
        pad_rc(P['pw1'], 3 * D),    # rows 224:320
        pad_rc(P['pw2'], 128),      # rows 320:448  (rows D..127 zero)
    ], axis=0).astype(jnp.bfloat16)

    b_in = P['b_in'].at[:, :D].multiply(scale)      # Q bias gets the same scale
    vpack = jnp.concatenate([
        pad_rc(P['ln1_g'], 1), pad_rc(P['ln1_b'], 1),
        pad_rc(P['ln2_g'], 1), pad_rc(P['ln2_b'], 1),
        pad_rc(b_in, 1), pad_rc(P['b_out'], 1),
        pad_rc(P['b1'], 1), pad_rc(P['b2'], 1),
        pad_rc(P['pb1'], 1), pad_rc(P['pb2'], 1),
    ], axis=0).astype(jnp.float32)
    return wpack, vpack


# ---------------- Pallas wrapper ----------------
def encoder_pred(xt, bias, wpack, vpack, TB):
    """xt: (2, B_pad, S, D) bf16, bias: (2, B_pad, S) f32 -> logits (B_pad, 128) f32."""
    T, B_pad, S, _ = xt.shape
    nstep = B_pad // TB
    G = _group_size(S)
    GS = G * S
    NG = (2 * TB) // G          # TB is a multiple of 8, G a pow2 <= 16 -> exact

    # key-padding bias regrouped to the kernel's (group, key) layout (lane-dense GS)
    kb = bias.reshape(T, nstep, TB, S).transpose(1, 0, 2, 3).reshape(nstep, NG, GS)
    # block-diagonal (same-board) additive mask, shared by every group / grid step
    bid = jnp.repeat(jnp.arange(G, dtype=jnp.int32), S)
    bd = jnp.where(bid[:, None] == bid[None, :], 0.0, NEG).astype(jnp.float32)

    cp = {"dimension_semantics": ("parallel",)}
    if TB > 32:                 # only raise the scoped-VMEM cap when blocks are big
        cp["vmem_limit_bytes"] = 48 * 1024 * 1024

    return pl.pallas_call(
        fused_kernel,
        out_shape=jax.ShapeDtypeStruct((B_pad, OUT_PAD), jnp.float32),
        grid=(nstep,),
        in_specs=[
            pl.BlockSpec((T, TB, S, D), lambda i: (0, i, 0, 0)),   # activations (bf16)
            pl.BlockSpec((1, NG, GS), lambda i: (i, 0, 0)),        # key-padding bias
            pl.BlockSpec((GS, GS), lambda i: (0, 0)),              # block-diag mask
            pl.BlockSpec((W_ROWS, 128), lambda i: (0, 0)),         # packed weights (bf16)
            pl.BlockSpec((V_ROWS, 128), lambda i: (0, 0)),         # packed biases/gains
        ],
        out_specs=pl.BlockSpec((TB, OUT_PAD), lambda i: (i, 0)),
        compiler_params=pltpu.CompilerParams(**cp),
    )(xt, kb, bd, wpack, vpack)


# ---------------- plain-JAX glue (embedding lookups, reshapes) ----------------
def forward(boards, augments, emb, wpack, vpack):
    B, T, E, F = boards.shape
    A = augments.shape[-1]
    assert T == 2, "model pairs two boards per example"
    S = 1 + E + A

    character = boards[..., 0]                 # (B,T,E)
    tier = boards[..., 1]
    items = boards[..., 2:]

    ce = emb['character_emb'][character]       # (B,T,E,D)
    te = emb['tier_emb'][tier]
    ie = emb['item_emb'][items].sum(-2)
    ent = ce + te + ie
    ent = jnp.concatenate([ent, emb['item_emb'][augments]], axis=-2)   # (B,T,E+A,D)

    # entity_augment: zeros everywhere, last 3 positions -> index 1 (idx 0 is padding row)
    ea = jnp.zeros((B, T, E + A), dtype=jnp.int32).at[..., -3:].set(1)
    ent = ent + emb['entity_augment_emb'][ea]

    cls_e = jnp.broadcast_to(emb['cls_emb'][0], (B, T, 1, D))
    ent = jnp.concatenate([cls_e, ent], axis=-2)                       # (B,T,S,D)

    # (T, B, S, D) layout; activations shipped bf16 (halves per-step DMA bytes)
    xt = jnp.transpose(ent, (1, 0, 2, 3)).astype(jnp.bfloat16)

    mask = jnp.concatenate(
        [jnp.zeros((B, T, 1), dtype=bool), character == 0, augments == 0], axis=-1)
    bias = jnp.transpose(jnp.where(mask, NEG, 0.0).astype(jnp.float32), (1, 0, 2))  # (T,B,S)

    # TB board-pairs per grid step: multiple of 8, >= 2 grid steps when B allows
    TB = max(8, min(64, _round_up(-(-B // 2), 8)))
    B_pad = _round_up(B, TB)
    if B_pad != B:
        xt = jnp.pad(xt, ((0, 0), (0, B_pad - B), (0, 0), (0, 0)))
        bias = jnp.pad(bias, ((0, 0), (0, B_pad - B), (0, 0)))   # padded rows: unmasked, discarded

    out = encoder_pred(xt, bias, wpack, vpack, TB)               # (B_pad, 128)
    return out[:B, :3]


# ---------------- deterministic parameter init ----------------
def init_params(key):
    ks = jax.random.split(key, 12)

    def emb_t(k, n, d, pad0=True):
        w = jax.random.normal(k, (n, d), jnp.float32) * 0.02
        if pad0:
            w = w.at[0].set(0.0)
        return w

    def lin(k, fan_in, fan_out):  # weights stored pre-transposed: (fan_in, fan_out)
        k1, k2 = jax.random.split(k)
        bound = 1.0 / (fan_in ** 0.5)
        w = jax.random.uniform(k1, (fan_in, fan_out), jnp.float32, -bound, bound)
        b = jax.random.uniform(k2, (1, fan_out), jnp.float32, -bound, bound)
        return w, b

    P = {}
    P['character_emb'] = emb_t(ks[0], CHAMP_VOCAB, D)
    P['tier_emb'] = emb_t(ks[1], 4, D)
    P['item_emb'] = emb_t(ks[2], ITEM_VOCAB, D)
    P['cls_emb'] = emb_t(ks[3], 1, D, pad0=False)
    P['entity_augment_emb'] = emb_t(ks[4], 3, D)
    P['w_in'], P['b_in'] = lin(ks[5], D, 3 * D)
    P['w_out'], P['b_out'] = lin(ks[6], D, D)
    P['ln1_g'] = jnp.ones((1, D), jnp.float32)
    P['ln1_b'] = jnp.zeros((1, D), jnp.float32)
    P['ln2_g'] = jnp.ones((1, D), jnp.float32)
    P['ln2_b'] = jnp.zeros((1, D), jnp.float32)
    P['w1'], P['b1'] = lin(ks[7], D, FF)
    P['w2'], P['b2'] = lin(ks[8], FF, D)
    P['pw1'], P['pb1'] = lin(ks[9], 3 * D, D)
    P['pw2'], P['pb2'] = lin(ks[10], D, 3)
    return P


if __name__ == "__main__":
    key = jax.random.PRNGKey(0)
    kp, k1, k2, k3, k4 = jax.random.split(key, 5)
    P = init_params(kp)
    wpack, vpack = pack_params(P)            # packed once, outside the jitted forward
    emb = {k: P[k] for k in ('character_emb', 'tier_emb', 'item_emb',
                             'cls_emb', 'entity_augment_emb')}

    B, T, E, F, A = 2, 2, 4, 4, 3            # T must be 2 (the model pairs two boards)
    character = jax.random.randint(k1, (B, T, E), 0, CHAMP_VOCAB, dtype=jnp.int32)
    tier = jax.random.randint(k2, (B, T, E), 0, 4, dtype=jnp.int32)
    items = jax.random.randint(k3, (B, T, E, F - 2), 0, ITEM_VOCAB, dtype=jnp.int32)
    boards = jnp.concatenate([character[..., None], tier[..., None], items], axis=-1)
    augments = jax.random.randint(k4, (B, T, A), 0, ITEM_VOCAB, dtype=jnp.int32)

    out = jax.jit(forward)(boards, augments, emb, wpack, vpack)
    jax.block_until_ready(out)
    assert out.shape == (B, 3) and out.dtype == jnp.float32
    print("KERNEL_OK")
</pallas_src>

<mosaic_0001>
module attributes {stable_mosaic.version = 11 : i64} {
  func.func @fused_kernel(%arg0: i32, %arg1: memref<2x8x8x32xbf16, #tpu.memory_space<vmem>>, %arg2: memref<1x1x128xf32, #tpu.memory_space<vmem>>, %arg3: memref<128x128xf32, #tpu.memory_space<vmem>>, %arg4: memref<448x128xbf16, #tpu.memory_space<vmem>>, %arg5: memref<10x128xf32, #tpu.memory_space<vmem>>, %arg6: memref<8x128xf32, #tpu.memory_space<vmem>>) attributes {dimension_semantics = [#tpu.dimension_semantics<parallel>], iteration_bounds = array<i64: 1>, scalar_prefetch = 0 : i64, scratch_operands = 0 : i64, tpu.core_type = #tpu.core_type<tc>, window_params = [{transform_indices = @transform_0, window_bounds = array<i64: 2, 8, 8, 32>}, {transform_indices = @transform_1, window_bounds = array<i64: 1, 1, 128>}, {pipeline_mode = #tpu.pipeline_mode<synchronous>, transform_indices = @transform_2, window_bounds = array<i64: 128, 128>}, {pipeline_mode = #tpu.pipeline_mode<synchronous>, transform_indices = @transform_3, window_bounds = array<i64: 448, 128>}, {pipeline_mode = #tpu.pipeline_mode<synchronous>, transform_indices = @transform_4, window_bounds = array<i64: 10, 128>}, {transform_indices = @transform_5, window_bounds = array<i64: 8, 128>}]} {
    %c0 = arith.constant 0 : index
    %c0_0 = arith.constant 0 : index
    %c0_1 = arith.constant 0 : index
    %c0_2 = arith.constant 0 : index
    %0 = vector.load %arg1[%c0, %c0_0, %c0_1, %c0_2] : memref<2x8x8x32xbf16, #tpu.memory_space<vmem>>, vector<2x8x8x32xbf16>
    %1 = vector.shape_cast %0 : vector<2x8x8x32xbf16> to vector<128x32xbf16>
    %2 = arith.extf %1 : vector<128x32xbf16> to vector<128x32xf32>
    %c0_3 = arith.constant 0 : index
    %c0_4 = arith.constant 0 : index
    %3 = vector.load %arg5[%c0_3, %c0_4] : memref<10x128xf32, #tpu.memory_space<vmem>>, vector<1x32xf32>
    %c1 = arith.constant 1 : index
    %c0_5 = arith.constant 0 : index
    %4 = vector.load %arg5[%c1, %c0_5] : memref<10x128xf32, #tpu.memory_space<vmem>>, vector<1x32xf32>
    %c2 = arith.constant 2 : index
    %c0_6 = arith.constant 0 : index
    %5 = vector.load %arg5[%c2, %c0_6] : memref<10x128xf32, #tpu.memory_space<vmem>>, vector<1x32xf32>
    %c3 = arith.constant 3 : index
    %c0_7 = arith.constant 0 : index
    %6 = vector.load %arg5[%c3, %c0_7] : memref<10x128xf32, #tpu.memory_space<vmem>>, vector<1x32xf32>
    %c4 = arith.constant 4 : index
    %c0_8 = arith.constant 0 : index
    %7 = vector.load %arg5[%c4, %c0_8] : memref<10x128xf32, #tpu.memory_space<vmem>>, vector<1x128xf32>
    %c5 = arith.constant 5 : index
    %c0_9 = arith.constant 0 : index
    %8 = vector.load %arg5[%c5, %c0_9] : memref<10x128xf32, #tpu.memory_space<vmem>>, vector<1x128xf32>
    %c6 = arith.constant 6 : index
    %c0_10 = arith.constant 0 : index
    %9 = vector.load %arg5[%c6, %c0_10] : memref<10x128xf32, #tpu.memory_space<vmem>>, vector<1x128xf32>
    %c7 = arith.constant 7 : index
    %c0_11 = arith.constant 0 : index
    %10 = vector.load %arg5[%c7, %c0_11] : memref<10x128xf32, #tpu.memory_space<vmem>>, vector<1x128xf32>
    %c8 = arith.constant 8 : index
    %c0_12 = arith.constant 0 : index
    %11 = vector.load %arg5[%c8, %c0_12] : memref<10x128xf32, #tpu.memory_space<vmem>>, vector<1x128xf32>
    %c9 = arith.constant 9 : index
    %c0_13 = arith.constant 0 : index
    %12 = vector.load %arg5[%c9, %c0_13] : memref<10x128xf32, #tpu.memory_space<vmem>>, vector<1x128xf32>
    %c0_14 = arith.constant 0 : index
    %c0_15 = arith.constant 0 : index
    %13 = vector.load %arg4[%c0_14, %c0_15] : memref<448x128xbf16, #tpu.memory_space<vmem>>, vector<32x128xbf16>
    %c64 = arith.constant 64 : index
    %c0_16 = arith.constant 0 : index
    %14 = vector.load %arg4[%c64, %c0_16] : memref<448x128xbf16, #tpu.memory_space<vmem>>, vector<32x128xbf16>
    %c96 = arith.constant 96 : index
    %c0_17 = arith.constant 0 : index
    %15 = vector.load %arg4[%c96, %c0_17] : memref<448x128xbf16, #tpu.memory_space<vmem>>, vector<128x128xbf16>
    %c224 = arith.constant 224 : index
    %c0_18 = arith.constant 0 : index
    %16 = vector.load %arg4[%c224, %c0_18] : memref<448x128xbf16, #tpu.memory_space<vmem>>, vector<96x128xbf16>
    %c320 = arith.constant 320 : index
    %c0_19 = arith.constant 0 : index
    %17 = vector.load %arg4[%c320, %c0_19] : memref<448x128xbf16, #tpu.memory_space<vmem>>, vector<128x128xbf16>
    %cst = arith.constant dense<0.000000e+00> : vector<128xf32>
    %18 = vector.multi_reduction <add>, %2, %cst [1] : vector<128x32xf32> to vector<128xf32>
    %19 = vector.shape_cast %18 : vector<128xf32> to vector<128x1xf32>
    %cst_20 = arith.constant 3.200000e+01 : f32
    %20 = vector.broadcast %cst_20 : f32 to vector<128x1xf32>
    %21 = arith.divf %19, %20 : vector<128x1xf32>
    %22 = vector.broadcast %21 : vector<128x1xf32> to vector<128x32xf32>
    %23 = arith.subf %2, %22 : vector<128x32xf32>
    %24 = arith.mulf %23, %23 : vector<128x32xf32>
    %cst_21 = arith.constant dense<0.000000e+00> : vector<128xf32>
    %25 = vector.multi_reduction <add>, %24, %cst_21 [1] : vector<128x32xf32> to vector<128xf32>
    %26 = vector.shape_cast %25 : vector<128xf32> to vector<128x1xf32>
    %cst_22 = arith.constant 3.200000e+01 : f32
    %27 = vector.broadcast %cst_22 : f32 to vector<128x1xf32>
    %28 = arith.divf %26, %27 : vector<128x1xf32>
    %29 = vector.broadcast %21 : vector<128x1xf32> to vector<128x32xf32>
    %30 = arith.subf %2, %29 : vector<128x32xf32>
    %cst_23 = arith.constant 9.99999974E-6 : f32
    %31 = vector.broadcast %cst_23 : f32 to vector<128x1xf32>
    %32 = arith.addf %28, %31 : vector<128x1xf32>
    %33 = math.rsqrt %32 : vector<128x1xf32>
    %34 = vector.broadcast %33 : vector<128x1xf32> to vector<128x32xf32>
    %35 = arith.mulf %30, %34 : vector<128x32xf32>
    %36 = vector.broadcast %3 : vector<1x32xf32> to vector<128x32xf32>
    %37 = arith.mulf %35, %36 : vector<128x32xf32>
    %38 = vector.broadcast %4 : vector<1x32xf32> to vector<128x32xf32>
    %39 = arith.addf %37, %38 : vector<128x32xf32>
    %40 = arith.truncf %39 : vector<128x32xf32> to vector<128x32xbf16>
    %cst_24 = arith.constant dense<0.000000e+00> : vector<128x128xf32>
    %41 = tpu.matmul %40, %13, %cst_24 {dimension_numbers = #tpu.dot_dimension_numbers<[1], [0], [0], [1], [0, 0, 1, 1], [], []>} : vector<128x32xbf16>, vector<32x128xbf16>, vector<128x128xf32> -> vector<128x128xf32>
    %42 = vector.broadcast %7 : vector<1x128xf32> to vector<128x128xf32>
    %43 = arith.addf %41, %42 : vector<128x128xf32>
    %c0_25 = arith.constant 0 : index
    %c0_26 = arith.constant 0 : index
    %c0_27 = arith.constant 0 : index
    %44 = vector.load %arg2[%c0_25, %c0_26, %c0_27] : memref<1x1x128xf32, #tpu.memory_space<vmem>>, vector<1x1x128xf32>
    %c0_28 = arith.constant 0 : index
    %c0_29 = arith.constant 0 : index
    %45 = vector.load %arg3[%c0_28, %c0_29] : memref<128x128xf32, #tpu.memory_space<vmem>>, vector<128x128xf32>
    %46 = vector.shape_cast %45 : vector<128x128xf32> to vector<1x128x128xf32>
    %47 = vector.broadcast %44 : vector<1x1x128xf32> to vector<1x128x128xf32>
    %48 = arith.addf %47, %46 : vector<1x128x128xf32>
    %49 = vector.extract_strided_slice %43 {offsets = [0, 0], sizes = [128, 16], strides = [1, 1]} : vector<128x128xf32> to vector<128x16xf32>
    %50 = vector.shape_cast %49 : vector<128x16xf32> to vector<1x128x16xf32>
    %51 = arith.truncf %50 : vector<1x128x16xf32> to vector<1x128x16xbf16>
    %52 = vector.extract_strided_slice %43 {offsets = [0, 32], sizes = [128, 16], strides = [1, 1]} : vector<128x128xf32> to vector<128x16xf32>
    %53 = vector.shape_cast %52 : vector<128x16xf32> to vector<1x128x16xf32>
    %54 = arith.truncf %53 : vector<1x128x16xf32> to vector<1x128x16xbf16>
    %55 = vector.extract_strided_slice %43 {offsets = [0, 64], sizes = [128, 16], strides = [1, 1]} : vector<128x128xf32> to vector<128x16xf32>
    %56 = vector.shape_cast %55 : vector<128x16xf32> to vector<1x128x16xf32>
    %57 = arith.truncf %56 : vector<1x128x16xf32> to vector<1x128x16xbf16>
    "tpu.trace_start"() <{level = 10 : i32, message = "gqd,gkd->gqk"}> : () -> ()
    %cst_30 = arith.constant dense<0.000000e+00> : vector<1x128x128xf32>
    %58 = tpu.matmul %51, %54, %cst_30 {dimension_numbers = #tpu.dot_dimension_numbers<[2], [2], [1], [1], [0, 0, 0, 1, 1, 1], [0], [0]>} : vector<1x128x16xbf16>, vector<1x128x16xbf16>, vector<1x128x128xf32> -> vector<1x128x128xf32>
    "tpu.trace_stop"() : () -> ()
    %59 = arith.addf %58, %48 : vector<1x128x128xf32>
    %cst_31 = arith.constant dense<0xFF800000> : vector<1x128xf32>
    %60 = vector.multi_reduction <maximumf>, %59, %cst_31 [2] : vector<1x128x128xf32> to vector<1x128xf32>
    %61 = vector.shape_cast %60 : vector<1x128xf32> to vector<1x128x1xf32>
    %62 = vector.broadcast %61 : vector<1x128x1xf32> to vector<1x128x128xf32>
    %63 = arith.subf %59, %62 : vector<1x128x128xf32>
    %64 = math.exp %63 : vector<1x128x128xf32>
    %cst_32 = arith.constant dense<0.000000e+00> : vector<1x128xf32>
    %65 = vector.multi_reduction <add>, %64, %cst_32 [2] : vector<1x128x128xf32> to vector<1x128xf32>
    %66 = vector.shape_cast %65 : vector<1x128xf32> to vector<1x128x1xf32>
    %67 = tpu.reciprocal %66 {approx = true} : vector<1x128x1xf32> -> vector<1x128x1xf32>
    %68 = vector.broadcast %67 : vector<1x128x1xf32> to vector<1x128x128xf32>
    %69 = arith.mulf %64, %68 : vector<1x128x128xf32>
    %70 = arith.truncf %69 : vector<1x128x128xf32> to vector<1x128x128xbf16>
    "tpu.trace_start"() <{level = 10 : i32, message = "gqk,gkd->gqd"}> : () -> ()
    %cst_33 = arith.constant dense<0.000000e+00> : vector<1x128x16xf32>
    %71 = tpu.matmul %70, %57, %cst_33 {dimension_numbers = #tpu.dot_dimension_numbers<[2], [1], [1], [2], [0, 0, 0, 1, 1, 2], [0], [0]>} : vector<1x128x128xbf16>, vector<1x128x16xbf16>, vector<1x128x16xf32> -> vector<1x128x16xf32>
    "tpu.trace_stop"() : () -> ()
    %c32 = arith.constant 32 : index
    %c0_34 = arith.constant 0 : index
    %72 = vector.load %arg4[%c32, %c0_34] : memref<448x128xbf16, #tpu.memory_space<vmem>>, vector<16x128xbf16>
    %73 = vector.shape_cast %71 : vector<1x128x16xf32> to vector<128x16xf32>
    %74 = arith.truncf %73 : vector<128x16xf32> to vector<128x16xbf16>
    %cst_35 = arith.constant dense<0.000000e+00> : vector<128x128xf32>
    %75 = tpu.matmul %74, %72, %cst_35 {dimension_numbers = #tpu.dot_dimension_numbers<[1], [0], [0], [1], [0, 0, 1, 1], [], []>} : vector<128x16xbf16>, vector<16x128xbf16>, vector<128x128xf32> -> vector<128x128xf32>
    %76 = vector.broadcast %8 : vector<1x128xf32> to vector<128x128xf32>
    %77 = arith.addf %76, %75 : vector<128x128xf32>
    %78 = vector.extract_strided_slice %43 {offsets = [0, 16], sizes = [128, 16], strides = [1, 1]} : vector<128x128xf32> to vector<128x16xf32>
    %79 = vector.shape_cast %78 : vector<128x16xf32> to vector<1x128x16xf32>
    %80 = arith.truncf %79 : vector<1x128x16xf32> to vector<1x128x16xbf16>
    %81 = vector.extract_strided_slice %43 {offsets = [0, 48], sizes = [128, 16], strides = [1, 1]} : vector<128x128xf32> to vector<128x16xf32>
    %82 = vector.shape_cast %81 : vector<128x16xf32> to vector<1x128x16xf32>
    %83 = arith.truncf %82 : vector<1x128x16xf32> to vector<1x128x16xbf16>
    %84 = vector.extract_strided_slice %43 {offsets = [0, 80], sizes = [128, 16], strides = [1, 1]} : vector<128x128xf32> to vector<128x16xf32>
    %85 = vector.shape_cast %84 : vector<128x16xf32> to vector<1x128x16xf32>
    %86 = arith.truncf %85 : vector<1x128x16xf32> to vector<1x128x16xbf16>
    "tpu.trace_start"() <{level = 10 : i32, message = "gqd,gkd->gqk"}> : () -> ()
    %cst_36 = arith.constant dense<0.000000e+00> : vector<1x128x128xf32>
    %87 = tpu.matmul %80, %83, %cst_36 {dimension_numbers = #tpu.dot_dimension_numbers<[2], [2], [1], [1], [0, 0, 0, 1, 1, 1], [0], [0]>} : vector<1x128x16xbf16>, vector<1x128x16xbf16>, vector<1x128x128xf32> -> vector<1x128x128xf32>
    "tpu.trace_stop"() : () -> ()
    %88 = arith.addf %87, %48 : vector<1x128x128xf32>
    %cst_37 = arith.constant dense<0xFF800000> : vector<1x128xf32>
    %89 = vector.multi_reduction <maximumf>, %88, %cst_37 [2] : vector<1x128x128xf32> to vector<1x128xf32>
    %90 = vector.shape_cast %89 : vector<1x128xf32> to vector<1x128x1xf32>
    %91 = vector.broadcast %90 : vector<1x128x1xf32> to vector<1x128x128xf32>
    %92 = arith.subf %88, %91 : vector<1x128x128xf32>
    %93 = math.exp %92 : vector<1x128x128xf32>
    %cst_38 = arith.constant dense<0.000000e+00> : vector<1x128xf32>
    %94 = vector.multi_reduction <add>, %93, %cst_38 [2] : vector<1x128x128xf32> to vector<1x128xf32>
    %95 = vector.shape_cast %94 : vector<1x128xf32> to vector<1x128x1xf32>
    %96 = tpu.reciprocal %95 {approx = true} : vector<1x128x1xf32> -> vector<1x128x1xf32>
    %97 = vector.broadcast %96 : vector<1x128x1xf32> to vector<1x128x128xf32>
    %98 = arith.mulf %93, %97 : vector<1x128x128xf32>
    %99 = arith.truncf %98 : vector<1x128x128xf32> to vector<1x128x128xbf16>
    "tpu.trace_start"() <{level = 10 : i32, message = "gqk,gkd->gqd"}> : () -> ()
    %cst_39 = arith.constant dense<0.000000e+00> : vector<1x128x16xf32>
    %100 = tpu.matmul %99, %86, %cst_39 {dimension_numbers = #tpu.dot_dimension_numbers<[2], [1], [1], [2], [0, 0, 0, 1, 1, 2], [0], [0]>} : vector<1x128x128xbf16>, vector<1x128x16xbf16>, vector<1x128x16xf32> -> vector<1x128x16xf32>
    "tpu.trace_stop"() : () -> ()
    %c48 = arith.constant 48 : index
    %c0_40 = arith.constant 0 : index
    %101 = vector.load %arg4[%c48, %c0_40] : memref<448x128xbf16, #tpu.memory_space<vmem>>, vector<16x128xbf16>
    %102 = vector.shape_cast %100 : vector<1x128x16xf32> to vector<128x16xf32>
    %103 = arith.truncf %102 : vector<128x16xf32> to vector<128x16xbf16>
    %cst_41 = arith.constant dense<0.000000e+00> : vector<128x128xf32>
    %104 = tpu.matmul %103, %101, %cst_41 {dimension_numbers = #tpu.dot_dimension_numbers<[1], [0], [0], [1], [0, 0, 1, 1], [], []>} : vector<128x16xbf16>, vector<16x128xbf16>, vector<128x128xf32> -> vector<128x128xf32>
    %105 = arith.addf %77, %104 : vector<128x128xf32>
    %106 = vector.extract_strided_slice %105 {offsets = [0, 0], sizes = [128, 32], strides = [1, 1]} : vector<128x128xf32> to vector<128x32xf32>
    %107 = arith.addf %2, %106 : vector<128x32xf32>
    %cst_42 = arith.constant dense<0.000000e+00> : vector<128xf32>
    %108 = vector.multi_reduction <add>, %107, %cst_42 [1] : vector<128x32xf32> to vector<128xf32>
    %109 = vector.shape_cast %108 : vector<128xf32> to vector<128x1xf32>
    %cst_43 = arith.constant 3.200000e+01 : f32
    %110 = vector.broadcast %cst_43 : f32 to vector<128x1xf32>
    %111 = arith.divf %109, %110 : vector<128x1xf32>
    %112 = vector.broadcast %111 : vector<128x1xf32> to vector<128x32xf32>
    %113 = arith.subf %107, %112 : vector<128x32xf32>
    %114 = arith.mulf %113, %113 : vector<128x32xf32>
    %cst_44 = arith.constant dense<0.000000e+00> : vector<128xf32>
    %115 = vector.multi_reduction <add>, %114, %cst_44 [1] : vector<128x32xf32> to vector<128xf32>
    %116 = vector.shape_cast %115 : vector<128xf32> to vector<128x1xf32>
    %cst_45 = arith.constant 3.200000e+01 : f32
    %117 = vector.broadcast %cst_45 : f32 to vector<128x1xf32>
    %118 = arith.divf %116, %117 : vector<128x1xf32>
    %119 = vector.broadcast %111 : vector<128x1xf32> to vector<128x32xf32>
    %120 = arith.subf %107, %119 : vector<128x32xf32>
    %cst_46 = arith.constant 9.99999974E-6 : f32
    %121 = vector.broadcast %cst_46 : f32 to vector<128x1xf32>
    %122 = arith.addf %118, %121 : vector<128x1xf32>
    %123 = math.rsqrt %122 : vector<128x1xf32>
    %124 = vector.broadcast %123 : vector<128x1xf32> to vector<128x32xf32>
    %125 = arith.mulf %120, %124 : vector<128x32xf32>
    %126 = vector.broadcast %5 : vector<1x32xf32> to vector<128x32xf32>
    %127 = arith.mulf %125, %126 : vector<128x32xf32>
    %128 = vector.broadcast %6 : vector<1x32xf32> to vector<128x32xf32>
    %129 = arith.addf %127, %128 : vector<128x32xf32>
    %130 = arith.truncf %129 : vector<128x32xf32> to vector<128x32xbf16>
    %cst_47 = arith.constant dense<0.000000e+00> : vector<128x128xf32>
    %131 = tpu.matmul %130, %14, %cst_47 {dimension_numbers = #tpu.dot_dimension_numbers<[1], [0], [0], [1], [0, 0, 1, 1], [], []>} : vector<128x32xbf16>, vector<32x128xbf16>, vector<128x128xf32> -> vector<128x128xf32>
    %132 = vector.broadcast %9 : vector<1x128xf32> to vector<128x128xf32>
    %133 = arith.addf %131, %132 : vector<128x128xf32>
    %cst_48 = arith.constant 0.000000e+00 : f32
    %134 = vector.broadcast %cst_48 : f32 to vector<128x128xf32>
    %135 = arith.maximumf %133, %134 : vector<128x128xf32>
    %136 = arith.truncf %135 : vector<128x128xf32> to vector<128x128xbf16>
    %cst_49 = arith.constant dense<0.000000e+00> : vector<128x128xf32>
    %137 = tpu.matmul %136, %15, %cst_49 {dimension_numbers = #tpu.dot_dimension_numbers<[1], [0], [0], [1], [0, 0, 1, 1], [], []>} : vector<128x128xbf16>, vector<128x128xbf16>, vector<128x128xf32> -> vector<128x128xf32>
    %138 = vector.broadcast %10 : vector<1x128xf32> to vector<128x128xf32>
    %139 = arith.addf %137, %138 : vector<128x128xf32>
    %140 = vector.extract_strided_slice %139 {offsets = [0, 0], sizes = [128, 32], strides = [1, 1]} : vector<128x128xf32> to vector<128x32xf32>
    %141 = arith.addf %107, %140 : vector<128x32xf32>
    %142 = vector.shape_cast %141 : vector<128x32xf32> to vector<16x8x32xf32>
    %cst_50 = arith.constant dense<0.000000e+00> : vector<16x32xf32>
    %143 = vector.multi_reduction <add>, %142, %cst_50 [1] : vector<16x8x32xf32> to vector<16x32xf32>
    %cst_51 = arith.constant 1.250000e-01 : f32
    %144 = vector.broadcast %cst_51 : f32 to vector<16x32xf32>
    %145 = arith.mulf %143, %144 : vector<16x32xf32>
    %146 = vector.shape_cast %145 : vector<16x32xf32> to vector<2x8x32xf32>
    %147 = vector.extract_strided_slice %146 {offsets = [0, 0, 0], sizes = [1, 8, 32], strides = [1, 1, 1]} : vector<2x8x32xf32> to vector<1x8x32xf32>
    %148 = vector.shape_cast %147 : vector<1x8x32xf32> to vector<8x32xf32>
    %149 = vector.extract_strided_slice %146 {offsets = [1, 0, 0], sizes = [1, 8, 32], strides = [1, 1, 1]} : vector<2x8x32xf32> to vector<1x8x32xf32>
    %150 = vector.shape_cast %149 : vector<1x8x32xf32> to vector<8x32xf32>
    %151 = arith.subf %148, %150 : vector<8x32xf32>
    %152 = tpu.concatenate %148, %150, %151 in 1 : vector<8x32xf32>, vector<8x32xf32>, vector<8x32xf32> -> vector<8x96xf32>
    %153 = arith.truncf %152 : vector<8x96xf32> to vector<8x96xbf16>
    %cst_52 = arith.constant dense<0.000000e+00> : vector<8x128xf32>
    %154 = tpu.matmul %153, %16, %cst_52 {dimension_numbers = #tpu.dot_dimension_numbers<[1], [0], [0], [1], [0, 0, 1, 1], [], []>} : vector<8x96xbf16>, vector<96x128xbf16>, vector<8x128xf32> -> vector<8x128xf32>
    %155 = vector.broadcast %11 : vector<1x128xf32> to vector<8x128xf32>
    %156 = arith.addf %154, %155 : vector<8x128xf32>
    %cst_53 = arith.constant 0.000000e+00 : f32
    %157 = vector.broadcast %cst_53 : f32 to vector<8x128xf32>
    %158 = arith.maximumf %156, %157 : vector<8x128xf32>
    %159 = arith.truncf %158 : vector<8x128xf32> to vector<8x128xbf16>
    %cst_54 = arith.constant dense<0.000000e+00> : vector<8x128xf32>
    %160 = tpu.matmul %159, %17, %cst_54 {dimension_numbers = #tpu.dot_dimension_numbers<[1], [0], [0], [1], [0, 0, 1, 1], [], []>} : vector<8x128xbf16>, vector<128x128xbf16>, vector<8x128xf32> -> vector<8x128xf32>
    %161 = vector.broadcast %12 : vector<1x128xf32> to vector<8x128xf32>
    %162 = arith.addf %160, %161 : vector<8x128xf32>
    %c0_55 = arith.constant 0 : index
    %c0_56 = arith.constant 0 : index
    %163 = vector.load %arg6[%c0_55, %c0_56] : memref<8x128xf32, #tpu.memory_space<vmem>>, vector<8x128xf32>
    tpu.vector_store %arg6[%c0_55, %c0_56], %162 {strides = array<i32>} : memref<8x128xf32, #tpu.memory_space<vmem>>, vector<8x128xf32>,
    return
  }
  func.func @transform_0(%arg0: i32) -> (i32, i32, i32, i32) {
    %c0_i32 = arith.constant 0 : i32
    %c0_i32_0 = arith.constant 0 : i32
    %c0_i32_1 = arith.constant 0 : i32
    %c0_i32_2 = arith.constant 0 : i32
    return %c0_i32, %arg0, %c0_i32_0, %c0_i32_1 : i32, i32, i32, i32
  }
  func.func @transform_1(%arg0: i32) -> (i32, i32, i32) {
    %c0_i32 = arith.constant 0 : i32
    %c0_i32_0 = arith.constant 0 : i32
    %c0_i32_1 = arith.constant 0 : i32
    return %arg0, %c0_i32, %c0_i32_0 : i32, i32, i32
  }
  func.func @transform_2(%arg0: i32) -> (i32, i32) {
    %c0_i32 = arith.constant 0 : i32
    %c0_i32_0 = arith.constant 0 : i32
    %c0_i32_1 = arith.constant 0 : i32
    return %c0_i32, %c0_i32_0 : i32, i32
  }
  func.func @transform_3(%arg0: i32) -> (i32, i32) {
    %c0_i32 = arith.constant 0 : i32
    %c0_i32_0 = arith.constant 0 : i32
    %c0_i32_1 = arith.constant 0 : i32
    return %c0_i32, %c0_i32_0 : i32, i32
  }
  func.func @transform_4(%arg0: i32) -> (i32, i32) {
    %c0_i32 = arith.constant 0 : i32
    %c0_i32_0 = arith.constant 0 : i32
    %c0_i32_1 = arith.constant 0 : i32
    return %c0_i32, %c0_i32_0 : i32, i32
  }
  func.func @transform_5(%arg0: i32) -> (i32, i32) {
    %c0_i32 = arith.constant 0 : i32
    %c0_i32_0 = arith.constant 0 : i32
    return %arg0, %c0_i32 : i32, i32
  }
}

</mosaic_0001>

<llo_original>
// kernel: eq.12
$region0: #{eq.12}
  %s0 = inlined_call_operand.vmem [shape: s32[16,8], index: 0, kind: input, shape index: {}]
  %s1 = inlined_call_operand.vmem [shape: s32[128], index: 1, kind: output, shape index: {}]
  $region1: #{eq.12} parent=0
    #allocation0 [shape = 'u8[4096]{0}', space=vmem, size = 0x1000, scoped, tag = 'scoped mem for output reshape']
    %v2 = vld [vmem:[%s0] sm:$0x1]
    %vm3 = vcmask 64512
    %4 = vst.msk [vmem:[#allocation0] sm:$0x1] %vm3, %v2
    %s5 = scalar_lea.vmem %s0, 15
    %v6 = vld [vmem:[%s5] sm:$0x1]
    %7 = vrot.lane.b32.xlu0 %v6, 120
    %v8 = vpop.permute.xlu0 %7
    %vm9 = vcmask 1048512
    %10 = vst.msk [vmem:[#allocation0] sm:$0x1] %vm9, %v8
    %s11 = scalar_lea.vmem %s0, 14
    %v12 = vld [vmem:[%s11] sm:$0x1]
    %13 = vrot.lane.b32.xlu0 %v12, 112
    %v14 = vpop.permute.xlu0 %13
    %vm15 = vcmask 982912
    %16 = vst.msk [vmem:[#allocation0] sm:$0x1] %vm15, %v14
    %s17 = scalar_lea.vmem %s0, 13
    %v18 = vld [vmem:[%s17] sm:$0x1]
    %19 = vrot.lane.b32.xlu0 %v18, 104
    %v20 = vpop.permute.xlu0 %19
    %vm21 = vcmask 917312
    %22 = vst.msk [vmem:[#allocation0] sm:$0x1] %vm21, %v20
    %s23 = scalar_lea.vmem %s0, 12
    %v24 = vld [vmem:[%s23] sm:$0x1]
    %25 = vrot.lane.b32.xlu0 %v24, 96
    %v26 = vpop.permute.xlu0 %25
    %vm27 = vcmask 851712
    %28 = vst.msk [vmem:[#allocation0] sm:$0x1] %vm27, %v26
    %s29 = scalar_lea.vmem %s0, 11
    %v30 = vld [vmem:[%s29] sm:$0x1]
    %31 = vrot.lane.b32.xlu0 %v30, 88
    %v32 = vpop.permute.xlu0 %31
    %vm33 = vcmask 786112
    %34 = vst.msk [vmem:[#allocation0] sm:$0x1] %vm33, %v32
    %s35 = scalar_lea.vmem %s0, 10
    %v36 = vld [vmem:[%s35] sm:$0x1]
    %37 = vrot.lane.b32.xlu0 %v36, 80
    %v38 = vpop.permute.xlu0 %37
    %vm39 = vcmask 720512
    %40 = vst.msk [vmem:[#allocation0] sm:$0x1] %vm39, %v38
    %s41 = scalar_lea.vmem %s0, 9
    %v42 = vld [vmem:[%s41] sm:$0x1]
    %43 = vrot.lane.b32.xlu0 %v42, 72
    %v44 = vpop.permute.xlu0 %43
    %vm45 = vcmask 654912
    %46 = vst.msk [vmem:[#allocation0] sm:$0x1] %vm45, %v44
    %s47 = scalar_lea.vmem %s0, 8
    %v48 = vld [vmem:[%s47] sm:$0x1]
    %49 = vrot.lane.b32.xlu0 %v48, 64
    %v50 = vpop.permute.xlu0 %49
    %vm51 = vcmask 589312
    %52 = vst.msk [vmem:[#allocation0] sm:$0x1] %vm51, %v50
    %s53 = scalar_lea.vmem %s0, 7
    %v54 = vld [vmem:[%s53] sm:$0x1]
    %55 = vrot.lane.b32.xlu0 %v54, 56
    %v56 = vpop.permute.xlu0 %55
    %vm57 = vcmask 523712
    %58 = vst.msk [vmem:[#allocation0] sm:$0x1] %vm57, %v56
    %s59 = scalar_lea.vmem %s0, 6
    %v60 = vld [vmem:[%s59] sm:$0x1]
    %61 = vrot.lane.b32.xlu0 %v60, 48
    %v62 = vpop.permute.xlu0 %61
    %vm63 = vcmask 458112
    %64 = vst.msk [vmem:[#allocation0] sm:$0x1] %vm63, %v62
    %s65 = scalar_lea.vmem %s0, 5
    %v66 = vld [vmem:[%s65] sm:$0x1]
    %67 = vrot.lane.b32.xlu0 %v66, 40
    %v68 = vpop.permute.xlu0 %67
    %vm69 = vcmask 392512
    %70 = vst.msk [vmem:[#allocation0] sm:$0x1] %vm69, %v68
    %s71 = scalar_lea.vmem %s0, 4
    %v72 = vld [vmem:[%s71] sm:$0x1]
    %73 = vrot.lane.b32.xlu0 %v72, 32
    %v74 = vpop.permute.xlu0 %73
    %vm75 = vcmask 326912
    %76 = vst.msk [vmem:[#allocation0] sm:$0x1] %vm75, %v74
    %s77 = scalar_lea.vmem %s0, 3
    %v78 = vld [vmem:[%s77] sm:$0x1]
    %79 = vrot.lane.b32.xlu0 %v78, 24
    %v80 = vpop.permute.xlu0 %79
    %vm81 = vcmask 261312
    %82 = vst.msk [vmem:[#allocation0] sm:$0x1] %vm81, %v80
    %s83 = scalar_lea.vmem %s0, 2
    %v84 = vld [vmem:[%s83] sm:$0x1]
    %85 = vrot.lane.b32.xlu0 %v84, 16
    %v86 = vpop.permute.xlu0 %85
    %vm87 = vcmask 195712
    %88 = vst.msk [vmem:[#allocation0] sm:$0x1] %vm87, %v86
    %s89 = scalar_lea.vmem %s0, 1
    %v90 = vld [vmem:[%s89] sm:$0x1]
    %91 = vrot.lane.b32.xlu0 %v90, 8
    %v92 = vpop.permute.xlu0 %91
    %vm93 = vcmask 130112
    %94 = vst.msk [vmem:[#allocation0] sm:$0x1] %vm93, %v92
    %s96 = sshllo.u32 0, 1
    %v98 = vld [vmem:[#allocation0] sm:%s96]
    %s99 = sshllo.u32 0, 1
    %100 = vst [vmem:[%s1] sm:%s99] %v98

// kernel: forward.1
$region0: #{forward.1}
  #allocation0 [shape = 'u32[]', space=smem, size = 0x4, offset = 0x4, fixed_abs, tag = 'smem constant byte address 0x4 - core index']
  #allocation1 [shape = 'u32[144,128]{1,0:T(1,128)}', space=vmem, size = 0x12000, scoped, tag = 'internal scratch']
  %s0 = inlined_call_operand.vmem [shape: bf16[2,8,8,32], index: 0, kind: input, shape index: {}]
  %s1 = inlined_call_operand.vmem [shape: f32[1,1,128], index: 1, kind: input, shape index: {}]
  %s2 = inlined_call_operand.vmem [shape: f32[128,128], index: 2, kind: input, shape index: {}]
  %s3 = inlined_call_operand.vmem [shape: bf16[448,128], index: 3, kind: input, shape index: {}]
  %s4 = inlined_call_operand.vmem [shape: f32[10,128], index: 4, kind: input, shape index: {}]
  %s5 = inlined_call_operand.vmem [shape: f32[8,128], index: 5, kind: output, shape index: {}]
  %s6 = sld [smem:[#allocation0]]
  $region30: #{forward.1} parent=0
    _
  %s8 = ssub.s32 1, %s6
  %s9 = scalar_select 0, %s8, %s6
  // Predicated region
  $region2: #{forward.1} parent=0 // pred_check
    _
  $region3: #{forward.1} parent=0 // pred_check_branch
    %11 = sbr.rel (0) target = $region5
  $region4: #{forward.1} parent=0 // pred_region
    _
  $region5: #{forward.1} parent=0 // pred_fallthru
    _
  // Predicated region
  $region6: #{forward.1} parent=0 // pred_check
    _
  $region7: #{forward.1} parent=0 // pred_check_branch
    %13 = sbr.rel (0) target = $region9
  $region8: #{forward.1} parent=0 // pred_region
    _
  $region9: #{forward.1} parent=0 // pred_fallthru
    _
  // Predicated region
  $region10: #{forward.1} parent=0 // pred_check
    _
  $region11: #{forward.1} parent=0 // pred_check_branch
    %15 = sbr.rel (0) target = $region13
  $region12: #{forward.1} parent=0 // pred_region
    _
  $region13: #{forward.1} parent=0 // pred_fallthru
    _
  // Predicated region
  $region14: #{forward.1} parent=0 // pred_check
    _
  $region15: #{forward.1} parent=0 // pred_check_branch
    %17 = sbr.rel (0) target = $region17
  $region16: #{forward.1} parent=0 // pred_region
    _
  $region17: #{forward.1} parent=0 // pred_fallthru
    _
  // Predicated region
  $region18: #{forward.1} parent=0 // pred_check
    _
  $region19: #{forward.1} parent=0 // pred_check_branch
    %19 = sbr.rel (0) target = $region21
  $region20: #{forward.1} parent=0 // pred_region
    _
  $region21: #{forward.1} parent=0 // pred_fallthru
    _
  %v21 = vld [vmem:[%s0] sm:$0xf]
  %v22 = vld [vmem:[%s0 + $0x4] sm:$0xf]
  %v23 = vld [vmem:[%s0 + $0x8] sm:$0xf]
  %v24 = vld [vmem:[%s0 + $0xc] sm:$0xf]
  %v25 = vld [vmem:[%s0 + $0x10] sm:$0xf]
  %v26 = vld [vmem:[%s0 + $0x14] sm:$0xf]
  %v27 = vld [vmem:[%s0 + $0x18] sm:$0xf]
  %v28 = vld [vmem:[%s0 + $0x1c] sm:$0xf]
  %v29 = vld [vmem:[%s0 + $0x20] sm:$0xf]
  %v30 = vld [vmem:[%s0 + $0x24] sm:$0xf]
  %v31 = vld [vmem:[%s0 + $0x28] sm:$0xf]
  %v32 = vld [vmem:[%s0 + $0x2c] sm:$0xf]
  %v33 = vld [vmem:[%s0 + $0x30] sm:$0xf]
  %v34 = vld [vmem:[%s0 + $0x34] sm:$0xf]
  %v35 = vld [vmem:[%s0 + $0x38] sm:$0xf]
  %v36 = vld [vmem:[%s0 + $0x3c] sm:$0xf]
  %v37 = vunpack.c.l.bf16 %v21
  %v38 = vunpack.c.l.bf16 %v22
  %v39 = vunpack.c.l.bf16 %v23
  %v40 = vunpack.c.l.bf16 %v24
  %v41 = vunpack.c.l.bf16 %v25
  %v42 = vunpack.c.l.bf16 %v26
  %v43 = vunpack.c.l.bf16 %v27
  %v44 = vunpack.c.l.bf16 %v28
  %v45 = vunpack.c.l.bf16 %v29
  %v46 = vunpack.c.l.bf16 %v30
  %v47 = vunpack.c.l.bf16 %v31
  %v48 = vunpack.c.l.bf16 %v32
  %v49 = vunpack.c.l.bf16 %v33
  %v50 = vunpack.c.l.bf16 %v34
  %v51 = vunpack.c.l.bf16 %v35
  %v52 = vunpack.c.l.bf16 %v36
  %v53 = vld [vmem:[%s4] sm:$0x1]
  %v54 = vld [vmem:[%s4 + $0x1] sm:$0x1]
  %v55 = vld [vmem:[%s4 + $0x2] sm:$0x1]
  %v56 = vld [vmem:[%s4 + $0x3] sm:$0x1]
  %v57 = vld [vmem:[%s4 + $0x4] sm:$0x1]
  %v58 = vld [vmem:[%s4 + $0x5] sm:$0x1]
  %v59 = vld [vmem:[%s4 + $0x6] sm:$0x1]
  %v60 = vld [vmem:[%s4 + $0x7] sm:$0x1]
  %v61 = vld [vmem:[%s4 + $0x8] sm:$0x1]
  %v62 = vld [vmem:[%s4 + $0x9] sm:$0x1]
  %v63 = vld [vmem:[%s3] sm:$0xf]
  %v64 = vld [vmem:[%s3 + $0x4] sm:$0xf]
  %v65 = vld [vmem:[%s3 + $0x8] sm:$0xf]
  %v66 = vld [vmem:[%s3 + $0xc] sm:$0xf]
  %v67 = vld [vmem:[%s3 + $0x20] sm:$0xf]
  %v68 = vld [vmem:[%s3 + $0x24] sm:$0xf]
  %v69 = vld [vmem:[%s3 + $0x28] sm:$0xf]
  %v70 = vld [vmem:[%s3 + $0x2c] sm:$0xf]
  %v71 = vld [vmem:[%s3 + $0x30] sm:$0xf]
  %v72 = vld [vmem:[%s3 + $0x34] sm:$0xf]
  %v73 = vld [vmem:[%s3 + $0x38] sm:$0xf]
  %v74 = vld [vmem:[%s3 + $0x3c] sm:$0xf]
  %v75 = vld [vmem:[%s3 + $0x40] sm:$0xf]
  %v76 = vld [vmem:[%s3 + $0x44] sm:$0xf]
  %v77 = vld [vmem:[%s3 + $0x48] sm:$0xf]
  %v78 = vld [vmem:[%s3 + $0x4c] sm:$0xf]
  %v79 = vld [vmem:[%s3 + $0x50] sm:$0xf]
  %v80 = vld [vmem:[%s3 + $0x54] sm:$0xf]
  %v81 = vld [vmem:[%s3 + $0x58] sm:$0xf]
  %v82 = vld [vmem:[%s3 + $0x5c] sm:$0xf]
  %v83 = vld [vmem:[%s3 + $0x60] sm:$0xf]
  %v84 = vld [vmem:[%s3 + $0x64] sm:$0xf]
  %v85 = vld [vmem:[%s3 + $0x68] sm:$0xf]
  %v86 = vld [vmem:[%s3 + $0x6c] sm:$0xf]
  %v87 = vld [vmem:[%s3 + $0x70] sm:$0xf]
  %v88 = vld [vmem:[%s3 + $0x74] sm:$0xf]
  %v89 = vld [vmem:[%s3 + $0x78] sm:$0xf]
  %v90 = vld [vmem:[%s3 + $0x7c] sm:$0xf]
  %v91 = vld [vmem:[%s3 + $0x80] sm:$0xf]
  %v92 = vld [vmem:[%s3 + $0x84] sm:$0xf]
  %v93 = vld [vmem:[%s3 + $0x88] sm:$0xf]
  %v94 = vld [vmem:[%s3 + $0x8c] sm:$0xf]
  %v95 = vld [vmem:[%s3 + $0x90] sm:$0xf]
  %v96 = vld [vmem:[%s3 + $0x94] sm:$0xf]
  %v97 = vld [vmem:[%s3 + $0x98] sm:$0xf]
  %v98 = vld [vmem:[%s3 + $0x9c] sm:$0xf]
  %v99 = vld [vmem:[%s3 + $0xa0] sm:$0xf]
  %v100 = vld [vmem:[%s3 + $0xa4] sm:$0xf]
  %v101 = vld [vmem:[%s3 + $0xa8] sm:$0xf]
  %v102 = vld [vmem:[%s3 + $0xac] sm:$0xf]
  %v103 = vld [vmem:[%s3 + $0xb0] sm:$0xf]
  %v104 = vld [vmem:[%s3 + $0xb4] sm:$0xf]
  %v105 = vld [vmem:[%s3 + $0xb8] sm:$0xf]
  %v106 = vld [vmem:[%s3 + $0xbc] sm:$0xf]
  %v107 = vld [vmem:[%s3 + $0xc0] sm:$0xf]
  %v108 = vld [vmem:[%s3 + $0xc4] sm:$0xf]
  %v109 = vld [vmem:[%s3 + $0xc8] sm:$0xf]
  %v110 = vld [vmem:[%s3 + $0xcc] sm:$0xf]
  %v111 = vld [vmem:[%s3 + $0xd0] sm:$0xf]
  %v112 = vld [vmem:[%s3 + $0xd4] sm:$0xf]
  %v113 = vld [vmem:[%s3 + $0xd8] sm:$0xf]
  %v114 = vld [vmem:[%s3 + $0xdc] sm:$0xf]
  %vm115 = vcmask 261120
  %v116 = vsel %vm115, %v37, 0.0
  %117 = vadd.xlane.f32.xlu0 %v116
  %v118 = vpop.xlane.xlu0 %117
  %v119 = vsel %vm115, %v38, 0.0
  %120 = vadd.xlane.f32.xlu0 %v119
  %v121 = vpop.xlane.xlu0 %120
  %v122 = vsel %vm115, %v39, 0.0
  %123 = vadd.xlane.f32.xlu0 %v122
  %v124 = vpop.xlane.xlu0 %123
  %v125 = vsel %vm115, %v40, 0.0
  %126 = vadd.xlane.f32.xlu0 %v125
  %v127 = vpop.xlane.xlu0 %126
  %v128 = vsel %vm115, %v41, 0.0
  %129 = vadd.xlane.f32.xlu0 %v128
  %v130 = vpop.xlane.xlu0 %129
  %v131 = vsel %vm115, %v42, 0.0
  %132 = vadd.xlane.f32.xlu0 %v131
  %v133 = vpop.xlane.xlu0 %132
  %v134 = vsel %vm115, %v43, 0.0
  %135 = vadd.xlane.f32.xlu0 %v134
  %v136 = vpop.xlane.xlu0 %135
  %v137 = vsel %vm115, %v44, 0.0
  %138 = vadd.xlane.f32.xlu0 %v137
  %v139 = vpop.xlane.xlu0 %138
  %v140 = vsel %vm115, %v45, 0.0
  %141 = vadd.xlane.f32.xlu0 %v140
  %v142 = vpop.xlane.xlu0 %141
  %v143 = vsel %vm115, %v46, 0.0
  %144 = vadd.xlane.f32.xlu0 %v143
  %v145 = vpop.xlane.xlu0 %144
  %v146 = vsel %vm115, %v47, 0.0
  %147 = vadd.xlane.f32.xlu0 %v146
  %v148 = vpop.xlane.xlu0 %147
  %v149 = vsel %vm115, %v48, 0.0
  %150 = vadd.xlane.f32.xlu0 %v149
  %v151 = vpop.xlane.xlu0 %150
  %v152 = vsel %vm115, %v49, 0.0
  %153 = vadd.xlane.f32.xlu0 %v152
  %v154 = vpop.xlane.xlu0 %153
  %v155 = vsel %vm115, %v50, 0.0
  %156 = vadd.xlane.f32.xlu0 %v155
  %v157 = vpop.xlane.xlu0 %156
  %v158 = vsel %vm115, %v51, 0.0
  %159 = vadd.xlane.f32.xlu0 %v158
  %v160 = vpop.xlane.xlu0 %159
  %v161 = vsel %vm115, %v52, 0.0
  %162 = vadd.xlane.f32.xlu0 %v161
  %v163 = vpop.xlane.xlu0 %162
  %v164 = vrcp.pop 32.0
  %v165 = vmul.f32 %v118, %v164
  %v166 = vmul.f32 %v121, %v164
  %v167 = vmul.f32 %v124, %v164
  %v168 = vmul.f32 %v127, %v164
  %v169 = vmul.f32 %v130, %v164
  %v170 = vmul.f32 %v133, %v164
  %v171 = vmul.f32 %v136, %v164
  %v172 = vmul.f32 %v139, %v164
  %v173 = vmul.f32 %v142, %v164
  %v174 = vmul.f32 %v145, %v164
  %v175 = vmul.f32 %v148, %v164
  %v176 = vmul.f32 %v151, %v164
  %v177 = vmul.f32 %v154, %v164
  %v178 = vmul.f32 %v157, %v164
  %v179 = vmul.f32 %v160, %v164
  %v180 = vmul.f32 %v163, %v164
  %v181 = vsub.f32 %v37, %v165
  %v182 = vsub.f32 %v38, %v166
  %v183 = vsub.f32 %v39, %v167
  %v184 = vsub.f32 %v40, %v168
  %v185 = vsub.f32 %v41, %v169
  %v186 = vsub.f32 %v42, %v170
  %v187 = vsub.f32 %v43, %v171
  %v188 = vsub.f32 %v44, %v172
  %v189 = vsub.f32 %v45, %v173
  %v190 = vsub.f32 %v46, %v174
  %v191 = vsub.f32 %v47, %v175
  %v192 = vsub.f32 %v48, %v176
  %v193 = vsub.f32 %v49, %v177
  %v194 = vsub.f32 %v50, %v178
  %v195 = vsub.f32 %v51, %v179
  %v196 = vsub.f32 %v52, %v180
  %v197 = vmul.f32 %v181, %v181
  %v198 = vmul.f32 %v182, %v182
  %v199 = vmul.f32 %v183, %v183
  %v200 = vmul.f32 %v184, %v184
  %v201 = vmul.f32 %v185, %v185
  %v202 = vmul.f32 %v186, %v186
  %v203 = vmul.f32 %v187, %v187
  %v204 = vmul.f32 %v188, %v188
  %v205 = vmul.f32 %v189, %v189
  %v206 = vmul.f32 %v190, %v190
  %v207 = vmul.f32 %v191, %v191
  %v208 = vmul.f32 %v192, %v192
  %v209 = vmul.f32 %v193, %v193
  %v210 = vmul.f32 %v194, %v194
  %v211 = vmul.f32 %v195, %v195
  %v212 = vmul.f32 %v196, %v196
  %v213 = vsel %vm115, %v197, 0.0
  %214 = vadd.xlane.f32.xlu0 %v213
  %v215 = vpop.xlane.xlu0 %214
  %v216 = vsel %vm115, %v198, 0.0
  %217 = vadd.xlane.f32.xlu0 %v216
  %v218 = vpop.xlane.xlu0 %217
  %v219 = vsel %vm115, %v199, 0.0
  %220 = vadd.xlane.f32.xlu0 %v219
  %v221 = vpop.xlane.xlu0 %220
  %v222 = vsel %vm115, %v200, 0.0
  %223 = vadd.xlane.f32.xlu0 %v222
  %v224 = vpop.xlane.xlu0 %223
  %v225 = vsel %vm115, %v201, 0.0
  %226 = vadd.xlane.f32.xlu0 %v225
  %v227 = vpop.xlane.xlu0 %226
  %v228 = vsel %vm115, %v202, 0.0
  %229 = vadd.xlane.f32.xlu0 %v228
  %v230 = vpop.xlane.xlu0 %229
  %v231 = vsel %vm115, %v203, 0.0
  %232 = vadd.xlane.f32.xlu0 %v231
  %v233 = vpop.xlane.xlu0 %232
  %v234 = vsel %vm115, %v204, 0.0
  %235 = vadd.xlane.f32.xlu0 %v234
  %v236 = vpop.xlane.xlu0 %235
  %v237 = vsel %vm115, %v205, 0.0
  %238 = vadd.xlane.f32.xlu0 %v237
  %v239 = vpop.xlane.xlu0 %238
  %v240 = vsel %vm115, %v206, 0.0
  %241 = vadd.xlane.f32.xlu0 %v240
  %v242 = vpop.xlane.xlu0 %241
  %v243 = vsel %vm115, %v207, 0.0
  %244 = vadd.xlane.f32.xlu0 %v243
  %v245 = vpop.xlane.xlu0 %244
  %v246 = vsel %vm115, %v208, 0.0
  %247 = vadd.xlane.f32.xlu0 %v246
  %v248 = vpop.xlane.xlu0 %247
  %v249 = vsel %vm115, %v209, 0.0
  %250 = vadd.xlane.f32.xlu0 %v249
  %v251 = vpop.xlane.xlu0 %250
  %v252 = vsel %vm115, %v210, 0.0
  %253 = vadd.xlane.f32.xlu0 %v252
  %v254 = vpop.xlane.xlu0 %253
  %v255 = vsel %vm115, %v211, 0.0
  %256 = vadd.xlane.f32.xlu0 %v255
  %v257 = vpop.xlane.xlu0 %256
  %v258 = vsel %vm115, %v212, 0.0
  %259 = vadd.xlane.f32.xlu0 %v258
  %v260 = vpop.xlane.xlu0 %259
  %v261 = vmul.f32 %v215, %v164
  %v262 = vmul.f32 %v218, %v164
  %v263 = vmul.f32 %v221, %v164
  %v264 = vmul.f32 %v224, %v164
  %v265 = vmul.f32 %v227, %v164
  %v266 = vmul.f32 %v230, %v164
  %v267 = vmul.f32 %v233, %v164
  %v268 = vmul.f32 %v236, %v164
  %v269 = vmul.f32 %v239, %v164
  %v270 = vmul.f32 %v242, %v164
  %v271 = vmul.f32 %v245, %v164
  %v272 = vmul.f32 %v248, %v164
  %v273 = vmul.f32 %v251, %v164
  %v274 = vmul.f32 %v254, %v164
  %v275 = vmul.f32 %v257, %v164
  %v276 = vmul.f32 %v260, %v164
  %v277 = vadd.f32 %v261, 1e-05
  %v278 = vadd.f32 %v262, 1e-05
  %v279 = vadd.f32 %v263, 1e-05
  %v280 = vadd.f32 %v264, 1e-05
  %v281 = vadd.f32 %v265, 1e-05
  %v282 = vadd.f32 %v266, 1e-05
  %v283 = vadd.f32 %v267, 1e-05
  %v284 = vadd.f32 %v268, 1e-05
  %v285 = vadd.f32 %v269, 1e-05
  %v286 = vadd.f32 %v270, 1e-05
  %v287 = vadd.f32 %v271, 1e-05
  %v288 = vadd.f32 %v272, 1e-05
  %v289 = vadd.f32 %v273, 1e-05
  %v290 = vadd.f32 %v274, 1e-05
  %v291 = vadd.f32 %v275, 1e-05
  %v292 = vadd.f32 %v276, 1e-05
  %v293 = vrsqrt.pop %v277
  %v294 = vrsqrt.pop %v278
  %v295 = vrsqrt.pop %v279
  %v296 = vrsqrt.pop %v280
  %v297 = vrsqrt.pop %v281
  %v298 = vrsqrt.pop %v282
  %v299 = vrsqrt.pop %v283
  %v300 = vrsqrt.pop %v284
  %v301 = vrsqrt.pop %v285
  %v302 = vrsqrt.pop %v286
  %v303 = vrsqrt.pop %v287
  %v304 = vrsqrt.pop %v288
  %v305 = vrsqrt.pop %v289
  %v306 = vrsqrt.pop %v290
  %v307 = vrsqrt.pop %v291
  %v308 = vrsqrt.pop %v292
  %v309 = vmul.f32 %v181, %v293
  %v310 = vmul.f32 %v182, %v294
  %v311 = vmul.f32 %v183, %v295
  %v312 = vmul.f32 %v184, %v296
  %v313 = vmul.f32 %v185, %v297
  %v314 = vmul.f32 %v186, %v298
  %v315 = vmul.f32 %v187, %v299
  %v316 = vmul.f32 %v188, %v300
  %v317 = vmul.f32 %v189, %v301
  %v318 = vmul.f32 %v190, %v302
  %v319 = vmul.f32 %v191, %v303
  %v320 = vmul.f32 %v192, %v304
  %v321 = vmul.f32 %v193, %v305
  %v322 = vmul.f32 %v194, %v306
  %v323 = vmul.f32 %v195, %v307
  %v324 = vmul.f32 %v196, %v308
  %v325 = vlaneseq
  %v326 = vshrl.u32 %v325, 7
  %v327 = vsub.s32 0, %v326
  %v328 = vrot.slane %v53, %v327
  %v329 = vmul.f32 %v309, %v328
  %v330 = vmul.f32 %v310, %v328
  %v331 = vmul.f32 %v311, %v328
  %v332 = vmul.f32 %v312, %v328
  %v333 = vmul.f32 %v313, %v328
  %v334 = vmul.f32 %v314, %v328
  %v335 = vmul.f32 %v315, %v328
  %v336 = vmul.f32 %v316, %v328
  %v337 = vmul.f32 %v317, %v328
  %v338 = vmul.f32 %v318, %v328
  %v339 = vmul.f32 %v319, %v328
  %v340 = vmul.f32 %v320, %v328
  %v341 = vmul.f32 %v321, %v328
  %v342 = vmul.f32 %v322, %v328
  %v343 = vmul.f32 %v323, %v328
  %v344 = vmul.f32 %v324, %v328
  %v345 = vlaneseq
  %v346 = vshrl.u32 %v345, 7
  %v347 = vsub.s32 0, %v346
  %v348 = vrot.slane %v54, %v347
  %v349 = vadd.f32 %v329, %v348
  %v350 = vadd.f32 %v330, %v348
  %v351 = vadd.f32 %v331, %v348
  %v352 = vadd.f32 %v332, %v348
  %v353 = vadd.f32 %v333, %v348
  %v354 = vadd.f32 %v334, %v348
  %v355 = vadd.f32 %v335, %v348
  %v356 = vadd.f32 %v336, %v348
  %v357 = vadd.f32 %v337, %v348
  %v358 = vadd.f32 %v338, %v348
  %v359 = vadd.f32 %v339, %v348
  %v360 = vadd.f32 %v340, %v348
  %v361 = vadd.f32 %v341, %v348
  %v362 = vadd.f32 %v342, %v348
  %v363 = vadd.f32 %v343, %v348
  %v364 = vadd.f32 %v344, %v348
  %v365 = vpack.c.bf16 %v350, %v349
  %v366 = vpack.c.bf16 %v352, %v351
  %v367 = vpack.c.bf16 %v354, %v353
  %v368 = vpack.c.bf16 %v356, %v355
  %v369 = vpack.c.bf16 %v358, %v357
  %v370 = vpack.c.bf16 %v360, %v359
  %v371 = vpack.c.bf16 %v362, %v361
  %v372 = vpack.c.bf16 %v364, %v363
  %v373 = vlaneseq
  %v374 = vshrl.u32 %v373, 7
  %v375 = vsub.s32 0, %v374
  %v376 = vrot.slane %v57, %v375
  %v381 = vunpack.c.l.b16 %v63
  %v382 = vunpack.c.l.b16 %v64
  %v383 = vunpack.c.l.b16 %v65
  %v384 = vunpack.c.l.b16 %v66
  %v385 = vpack.c.b16 %v382, %v381
  %v386 = vpack.c.b16 %v384, %v383
  %v390 = vsel %vm115, %v365, 0
  %v393 = vsel %vm115, %v366, 0
  %v396 = vsel %vm115, %v367, 0
  %v399 = vsel %vm115, %v368, 0
  %v402 = vsel %vm115, %v369, 0
  %v405 = vsel %vm115, %v370, 0
  %v408 = vsel %vm115, %v371, 0
  %v411 = vsel %vm115, %v372, 0
  %413 = vmatprep.subr.bf16.mxu0 0
  %414 = vmatpush1.bf16.msra.mxu0 %v385
  %415 = vmatprep.subr.bf16.mxu0 0
  %416 = vmatpush1.bf16.msra.mxu0 %v386
  %417 = vmatprep.subr.bf16.mxu0 0
  %418 = vmatpush1.bf16.msra.mxu0 0
  %419 = vmatprep.subr.bf16.mxu0 0
  %420 = vmatpush1.bf16.msra.mxu0 0
  %421 = vmatprep.subr.bf16.mxu0 0
  %422 = vmatpush1.bf16.msra.mxu0 0
  %423 = vmatprep.subr.bf16.mxu0 0
  %424 = vmatpush1.bf16.msra.mxu0 0
  %425 = vmatprep.subr.bf16.mxu0 0
  %426 = vmatpush1.bf16.msra.mxu0 0
  %427 = vmatprep.subr.bf16.mxu0 0
  %428 = vmatpush1.bf16.msra.mxu0 0
  %429 = vmatprep.subr.bf16.mxu0 0
  %430 = vmatpush1.bf16.msra.mxu0 0
  %431 = vmatprep.subr.bf16.mxu0 0
  %432 = vmatpush1.bf16.msra.mxu0 0
  %433 = vmatprep.subr.bf16.mxu0 0
  %434 = vmatpush1.bf16.msra.mxu0 0
  %435 = vmatprep.subr.bf16.mxu0 0
  %436 = vmatpush1.bf16.msra.mxu0 0
  %437 = vmatprep.subr.bf16.mxu0 0
  %438 = vmatpush1.bf16.msra.mxu0 0
  %439 = vmatprep.subr.bf16.mxu0 0
  %440 = vmatpush1.bf16.msra.mxu0 0
  %441 = vmatprep.subr.bf16.mxu0 0
  %442 = vmatpush1.bf16.msra.mxu0 0
  %443 = vmatprep.subr.bf16.mxu0 0
  %444 = vmatpush1.bf16.msra.mxu0 0
  %445 = vmatprep.mubr.bf16.mxu0 0
  %446 = vmatmul.mubr.bf16.gmra.mrb[0].mxu0 %v390
  %v447 = vpop.f32.mrb[0].mxu0
  %v448 = vadd.f32 %v376, %v447
  %v449 = vpop.f32.mrb[0].mxu0
  %v450 = vpop.f32.mrb[0].mxu0
  %v451 = vadd.f32 %v376, %v450
  %v452 = vpop.f32.mrb[0].mxu0
  %453 = vmatprep.mubr.bf16.mxu0 0
  %454 = vmatmul.mubr.bf16.gmra.mrb[0].mxu0 %v393
  %v455 = vpop.f32.mrb[0].mxu0
  %v456 = vadd.f32 %v376, %v455
  %v457 = vpop.f32.mrb[0].mxu0
  %v458 = vpop.f32.mrb[0].mxu0
  %v459 = vadd.f32 %v376, %v458
  %v460 = vpop.f32.mrb[0].mxu0
  %461 = vmatprep.mubr.bf16.mxu0 0
  %462 = vmatmul.mubr.bf16.gmra.mrb[0].mxu0 %v396
  %v463 = vpop.f32.mrb[0].mxu0
  %v464 = vadd.f32 %v376, %v463
  %v465 = vpop.f32.mrb[0].mxu0
  %v466 = vpop.f32.mrb[0].mxu0
  %v467 = vadd.f32 %v376, %v466
  %v468 = vpop.f32.mrb[0].mxu0
  %469 = vmatprep.mubr.bf16.mxu0 0
  %470 = vmatmul.mubr.bf16.gmra.mrb[0].mxu0 %v399
  %v471 = vpop.f32.mrb[0].mxu0
  %v472 = vadd.f32 %v376, %v471
  %v473 = vpop.f32.mrb[0].mxu0
  %v474 = vpop.f32.mrb[0].mxu0
  %v475 = vadd.f32 %v376, %v474
  %v476 = vpop.f32.mrb[0].mxu0
  %477 = vmatprep.mubr.bf16.mxu0 0
  %478 = vmatmul.mubr.bf16.gmra.mrb[0].mxu0 %v402
  %v479 = vpop.f32.mrb[0].mxu0
  %v480 = vadd.f32 %v376, %v479
  %v481 = vpop.f32.mrb[0].mxu0
  %v482 = vpop.f32.mrb[0].mxu0
  %v483 = vadd.f32 %v376, %v482
  %v484 = vpop.f32.mrb[0].mxu0
  %485 = vmatprep.mubr.bf16.mxu0 0
  %486 = vmatmul.mubr.bf16.gmra.mrb[0].mxu0 %v405
  %v487 = vpop.f32.mrb[0].mxu0
  %v488 = vadd.f32 %v376, %v487
  %v489 = vpop.f32.mrb[0].mxu0
  %v490 = vpop.f32.mrb[0].mxu0
  %v491 = vadd.f32 %v376, %v490
  %v492 = vpop.f32.mrb[0].mxu0
  %493 = vmatprep.mubr.bf16.mxu0 0
  %494 = vmatmul.mubr.bf16.gmra.mrb[0].mxu0 %v408
  %v495 = vpop.f32.mrb[0].mxu0
  %v496 = vadd.f32 %v376, %v495
  %v497 = vpop.f32.mrb[0].mxu0
  %v498 = vpop.f32.mrb[0].mxu0
  %v499 = vadd.f32 %v376, %v498
  %v500 = vpop.f32.mrb[0].mxu0
  %501 = vmatprep.mubr.bf16.mxu0 0
  %502 = vmatmul.mubr.bf16.gmra.mrb[0].mxu0 %v411
  %v503 = vpop.f32.mrb[0].mxu0
  %v504 = vadd.f32 %v376, %v503
  %v505 = vpop.f32.mrb[0].mxu0
  %v506 = vpop.f32.mrb[0].mxu0
  %v507 = vadd.f32 %v376, %v506
  %v508 = vpop.f32.mrb[0].mxu0
  %509 = vdwg.mxu0
  %v510 = vld [vmem:[%s1] sm:$0x1]
  %v511 = vld [vmem:[%s2] sm:$0xff]
  %v512 = vld [vmem:[%s2 + $0x8] sm:$0xff]
  %v513 = vld [vmem:[%s2 + $0x10] sm:$0xff]
  %v514 = vld [vmem:[%s2 + $0x18] sm:$0xff]
  %v515 = vld [vmem:[%s2 + $0x20] sm:$0xff]
  %v516 = vld [vmem:[%s2 + $0x28] sm:$0xff]
  %v517 = vld [vmem:[%s2 + $0x30] sm:$0xff]
  %v518 = vld [vmem:[%s2 + $0x38] sm:$0xff]
  %v519 = vld [vmem:[%s2 + $0x40] sm:$0xff]
  %v520 = vld [vmem:[%s2 + $0x48] sm:$0xff]
  %v521 = vld [vmem:[%s2 + $0x50] sm:$0xff]
  %v522 = vld [vmem:[%s2 + $0x58] sm:$0xff]
  %v523 = vld [vmem:[%s2 + $0x60] sm:$0xff]
  %v524 = vld [vmem:[%s2 + $0x68] sm:$0xff]
  %v525 = vld [vmem:[%s2 + $0x70] sm:$0xff]
  %v526 = vld [vmem:[%s2 + $0x78] sm:$0xff]
  %v528 = vlaneseq
  %v529 = vshrl.u32 %v528, 7
  %v530 = vsub.s32 0, %v529
  %v531 = vrot.slane %v510, %v530
  %v533 = vadd.f32 %v531, %v511
  %v534 = vadd.f32 %v531, %v512
  %v535 = vadd.f32 %v531, %v513
  %v536 = vadd.f32 %v531, %v514
  %v537 = vadd.f32 %v531, %v515
  %v538 = vadd.f32 %v531, %v516
  %v539 = vadd.f32 %v531, %v517
  %v540 = vadd.f32 %v531, %v518
  %v541 = vadd.f32 %v531, %v519
  %v542 = vadd.f32 %v531, %v520
  %v543 = vadd.f32 %v531, %v521
  %v544 = vadd.f32 %v531, %v522
  %v545 = vadd.f32 %v531, %v523
  %v546 = vadd.f32 %v531, %v524
  %v547 = vadd.f32 %v531, %v525
  %v548 = vadd.f32 %v531, %v526
  %v549 = vpack.c.bf16 %v451, %v448
  %v550 = vpack.c.bf16 %v459, %v456
  %v551 = vpack.c.bf16 %v467, %v464
  %v552 = vpack.c.bf16 %v475, %v472
  %v553 = vpack.c.bf16 %v483, %v480
  %v554 = vpack.c.bf16 %v491, %v488
  %v555 = vpack.c.bf16 %v499, %v496
  %v556 = vpack.c.bf16 %v507, %v504
  %565 = vrot.lane.b32.xlu0 %v549, 96
  %v566 = vpop.permute.xlu0 %565
  %567 = vrot.lane.b32.xlu0 %v550, 96
  %v568 = vpop.permute.xlu0 %567
  %569 = vrot.lane.b32.xlu0 %v551, 96
  %v570 = vpop.permute.xlu0 %569
  %571 = vrot.lane.b32.xlu0 %v552, 96
  %v572 = vpop.permute.xlu0 %571
  %573 = vrot.lane.b32.xlu0 %v553, 96
  %v574 = vpop.permute.xlu0 %573
  %575 = vrot.lane.b32.xlu0 %v554, 96
  %v576 = vpop.permute.xlu0 %575
  %577 = vrot.lane.b32.xlu0 %v555, 96
  %v578 = vpop.permute.xlu0 %577
  %579 = vrot.lane.b32.xlu0 %v556, 96
  %v580 = vpop.permute.xlu0 %579
  %vm581 = vcmask 130048
  %v583 = vsel %vm581, %v549, 0
  %v586 = vsel %vm581, %v550, 0
  %v589 = vsel %vm581, %v551, 0
  %v592 = vsel %vm581, %v552, 0
  %v595 = vsel %vm581, %v553, 0
  %v598 = vsel %vm581, %v554, 0
  %v601 = vsel %vm581, %v555, 0
  %v604 = vsel %vm581, %v556, 0
  %v607 = vsel %vm581, %v566, 0
  %v610 = vsel %vm581, %v568, 0
  %v613 = vsel %vm581, %v570, 0
  %v616 = vsel %vm581, %v572, 0
  %v619 = vsel %vm581, %v574, 0
  %v622 = vsel %vm581, %v576, 0
  %v625 = vsel %vm581, %v578, 0
  %v628 = vsel %vm581, %v580, 0
  %630 = vmatprep.subr.bf16.mxu0 0
  %631 = vmatpush1.bf16.xpose.msra.mxu0 %v607
  %632 = vmatprep.subr.bf16.mxu0 0
  %633 = vmatpush1.bf16.xpose.msra.mxu0 %v610
  %634 = vmatprep.subr.bf16.mxu0 0
  %635 = vmatpush1.bf16.xpose.msra.mxu0 %v613
  %636 = vmatprep.subr.bf16.mxu0 0
  %637 = vmatpush1.bf16.xpose.msra.mxu0 %v616
  %638 = vmatprep.subr.bf16.mxu0 0
  %639 = vmatpush1.bf16.xpose.msra.mxu0 %v619
  %640 = vmatprep.subr.bf16.mxu0 0
  %641 = vmatpush1.bf16.xpose.msra.mxu0 %v622
  %642 = vmatprep.subr.bf16.mxu0 0
  %643 = vmatpush1.bf16.xpose.msra.mxu0 %v625
  %644 = vmatprep.subr.bf16.mxu0 0
  %645 = vmatpush1.bf16.xpose.msra.mxu0 %v628
  %646 = vmatprep.subr.bf16.mxu0 0
  %647 = vmatpush1.bf16.xpose.msra.mxu0 0
  %648 = vmatprep.subr.bf16.mxu0 0
  %649 = vmatpush1.bf16.xpose.msra.mxu0 0
  %650 = vmatprep.subr.bf16.mxu0 0
  %651 = vmatpush1.bf16.xpose.msra.mxu0 0
  %652 = vmatprep.subr.bf16.mxu0 0
  %653 = vmatpush1.bf16.xpose.msra.mxu0 0
  %654 = vmatprep.subr.bf16.mxu0 0
  %655 = vmatpush1.bf16.xpose.msra.mxu0 0
  %656 = vmatprep.subr.bf16.mxu0 0
  %657 = vmatpush1.bf16.xpose.msra.mxu0 0
  %658 = vmatprep.subr.bf16.mxu0 0
  %659 = vmatpush1.bf16.xpose.msra.mxu0 0
  %660 = vmatprep.subr.bf16.mxu0 0
  %661 = vmatpush1.bf16.xpose.msra.mxu0 0
  %662 = vmatprep.mubr.bf16.mxu0 0
  %663 = vmatmul.mubr.bf16.gmra.mrb[0].mxu0 %v583
  %v664 = vpop.f32.mrb[0].mxu0
  %v665 = vadd.f32 %v533, %v664
  %v666 = vpop.f32.mrb[0].mxu0
  %v667 = vpop.f32.mrb[0].mxu0
  %v668 = vadd.f32 %v534, %v667
  %v669 = vpop.f32.mrb[0].mxu0
  %670 = vmatprep.mubr.bf16.mxu0 0
  %671 = vmatmul.mubr.bf16.gmra.mrb[0].mxu0 %v586
  %v672 = vpop.f32.mrb[0].mxu0
  %v673 = vadd.f32 %v535, %v672
  %v674 = vpop.f32.mrb[0].mxu0
  %v675 = vpop.f32.mrb[0].mxu0
  %v676 = vadd.f32 %v536, %v675
  %v677 = vpop.f32.mrb[0].mxu0
  %678 = vmatprep.mubr.bf16.mxu0 0
  %679 = vmatmul.mubr.bf16.gmra.mrb[0].mxu0 %v589
  %v680 = vpop.f32.mrb[0].mxu0
  %v681 = vadd.f32 %v537, %v680
  %v682 = vpop.f32.mrb[0].mxu0
  %v683 = vpop.f32.mrb[0].mxu0
  %v684 = vadd.f32 %v538, %v683
  %v685 = vpop.f32.mrb[0].mxu0
  %686 = vmatprep.mubr.bf16.mxu0 0
  %687 = vmatmul.mubr.bf16.gmra.mrb[0].mxu0 %v592
  %v688 = vpop.f32.mrb[0].mxu0
  %v689 = vadd.f32 %v539, %v688
  %v690 = vpop.f32.mrb[0].mxu0
  %v691 = vpop.f32.mrb[0].mxu0
  %v692 = vadd.f32 %v540, %v691
  %v693 = vpop.f32.mrb[0].mxu0
  %694 = vmatprep.mubr.bf16.mxu0 0
  %695 = vmatmul.mubr.bf16.gmra.mrb[0].mxu0 %v595
  %v696 = vpop.f32.mrb[0].mxu0
  %v697 = vadd.f32 %v541, %v696
  %v698 = vpop.f32.mrb[0].mxu0
  %v699 = vpop.f32.mrb[0].mxu0
  %v700 = vadd.f32 %v542, %v699
  %v701 = vpop.f32.mrb[0].mxu0
  %702 = vmatprep.mubr.bf16.mxu0 0
  %703 = vmatmul.mubr.bf16.gmra.mrb[0].mxu0 %v598
  %v704 = vpop.f32.mrb[0].mxu0
  %v705 = vadd.f32 %v543, %v704
  %v706 = vpop.f32.mrb[0].mxu0
  %v707 = vpop.f32.mrb[0].mxu0
  %v708 = vadd.f32 %v544, %v707
  %v709 = vpop.f32.mrb[0].mxu0
  %710 = vmatprep.mubr.bf16.mxu0 0
  %711 = vmatmul.mubr.bf16.gmra.mrb[0].mxu0 %v601
  %v712 = vpop.f32.mrb[0].mxu0
  %v713 = vadd.f32 %v545, %v712
  %v714 = vpop.f32.mrb[0].mxu0
  %v715 = vpop.f32.mrb[0].mxu0
  %v716 = vadd.f32 %v546, %v715
  %v717 = vpop.f32.mrb[0].mxu0
  %718 = vmatprep.mubr.bf16.mxu0 0
  %719 = vmatmul.mubr.bf16.gmra.mrb[0].mxu0 %v604
  %v720 = vpop.f32.mrb[0].mxu0
  %v721 = vadd.f32 %v547, %v720
  %v722 = vpop.f32.mrb[0].mxu0
  %v723 = vpop.f32.mrb[0].mxu0
  %v724 = vadd.f32 %v548, %v723
  %v725 = vpop.f32.mrb[0].mxu0
  %726 = vdwg.mxu0
  %727 = vmax.xlane.f32.xlu0 %v665
  %v728 = vpop.xlane.xlu0 %727
  %729 = vmax.xlane.f32.xlu0 %v668
  %v730 = vpop.xlane.xlu0 %729
  %731 = vmax.xlane.f32.xlu0 %v673
  %v732 = vpop.xlane.xlu0 %731
  %733 = vmax.xlane.f32.xlu0 %v676
  %v734 = vpop.xlane.xlu0 %733
  %735 = vmax.xlane.f32.xlu0 %v681
  %v736 = vpop.xlane.xlu0 %735
  %737 = vmax.xlane.f32.xlu0 %v684
  %v738 = vpop.xlane.xlu0 %737
  %739 = vmax.xlane.f32.xlu0 %v689
  %v740 = vpop.xlane.xlu0 %739
  %741 = vmax.xlane.f32.xlu0 %v692
  %v742 = vpop.xlane.xlu0 %741
  %743 = vmax.xlane.f32.xlu0 %v697
  %v744 = vpop.xlane.xlu0 %743
  %745 = vmax.xlane.f32.xlu0 %v700
  %v746 = vpop.xlane.xlu0 %745
  %747 = vmax.xlane.f32.xlu0 %v705
  %v748 = vpop.xlane.xlu0 %747
  %749 = vmax.xlane.f32.xlu0 %v708
  %v750 = vpop.xlane.xlu0 %749
  %751 = vmax.xlane.f32.xlu0 %v713
  %v752 = vpop.xlane.xlu0 %751
  %753 = vmax.xlane.f32.xlu0 %v716
  %v754 = vpop.xlane.xlu0 %753
  %755 = vmax.xlane.f32.xlu0 %v721
  %v756 = vpop.xlane.xlu0 %755
  %757 = vmax.xlane.f32.xlu0 %v724
  %v758 = vpop.xlane.xlu0 %757
  %v759 = vsub.f32 %v665, %v728
  %v760 = vsub.f32 %v668, %v730
  %v761 = vsub.f32 %v673, %v732
  %v762 = vsub.f32 %v676, %v734
  %v763 = vsub.f32 %v681, %v736
  %v764 = vsub.f32 %v684, %v738
  %v765 = vsub.f32 %v689, %v740
  %v766 = vsub.f32 %v692, %v742
  %v767 = vsub.f32 %v697, %v744
  %v768 = vsub.f32 %v700, %v746
  %v769 = vsub.f32 %v705, %v748
  %v770 = vsub.f32 %v708, %v750
  %v771 = vsub.f32 %v713, %v752
  %v772 = vsub.f32 %v716, %v754
  %v773 = vsub.f32 %v721, %v756
  %v774 = vsub.f32 %v724, %v758
  %v775 = vmul.f32 %v759, 1.442695
  %v776 = vpow.pop %v775
  %v777 = vmul.f32 %v760, 1.442695
  %v778 = vpow.pop %v777
  %v779 = vmul.f32 %v761, 1.442695
  %v780 = vpow.pop %v779
  %v781 = vmul.f32 %v762, 1.442695
  %v782 = vpow.pop %v781
  %v783 = vmul.f32 %v763, 1.442695
  %v784 = vpow.pop %v783
  %v785 = vmul.f32 %v764, 1.442695
  %v786 = vpow.pop %v785
  %v787 = vmul.f32 %v765, 1.442695
  %v788 = vpow.pop %v787
  %v789 = vmul.f32 %v766, 1.442695
  %v790 = vpow.pop %v789
  %v791 = vmul.f32 %v767, 1.442695
  %v792 = vpow.pop %v791
  %v793 = vmul.f32 %v768, 1.442695
  %v794 = vpow.pop %v793
  %v795 = vmul.f32 %v769, 1.442695
  %v796 = vpow.pop %v795
  %v797 = vmul.f32 %v770, 1.442695
  %v798 = vpow.pop %v797
  %v799 = vmul.f32 %v771, 1.442695
  %v800 = vpow.pop %v799
  %v801 = vmul.f32 %v772, 1.442695
  %v802 = vpow.pop %v801
  %v803 = vmul.f32 %v773, 1.442695
  %v804 = vpow.pop %v803
  %v805 = vmul.f32 %v774, 1.442695
  %v806 = vpow.pop %v805
  %807 = vadd.xlane.f32.xlu0 %v776
  %v808 = vpop.xlane.xlu0 %807
  %809 = vadd.xlane.f32.xlu0 %v778
  %v810 = vpop.xlane.xlu0 %809
  %811 = vadd.xlane.f32.xlu0 %v780
  %v812 = vpop.xlane.xlu0 %811
  %813 = vadd.xlane.f32.xlu0 %v782
  %v814 = vpop.xlane.xlu0 %813
  %815 = vadd.xlane.f32.xlu0 %v784
  %v816 = vpop.xlane.xlu0 %815
  %817 = vadd.xlane.f32.xlu0 %v786
  %v818 = vpop.xlane.xlu0 %817
  %819 = vadd.xlane.f32.xlu0 %v788
  %v820 = vpop.xlane.xlu0 %819
  %821 = vadd.xlane.f32.xlu0 %v790
  %v822 = vpop.xlane.xlu0 %821
  %823 = vadd.xlane.f32.xlu0 %v792
  %v824 = vpop.xlane.xlu0 %823
  %825 = vadd.xlane.f32.xlu0 %v794
  %v826 = vpop.xlane.xlu0 %825
  %827 = vadd.xlane.f32.xlu0 %v796
  %v828 = vpop.xlane.xlu0 %827
  %829 = vadd.xlane.f32.xlu0 %v798
  %v830 = vpop.xlane.xlu0 %829
  %831 = vadd.xlane.f32.xlu0 %v800
  %v832 = vpop.xlane.xlu0 %831
  %833 = vadd.xlane.f32.xlu0 %v802
  %v834 = vpop.xlane.xlu0 %833
  %835 = vadd.xlane.f32.xlu0 %v804
  %v836 = vpop.xlane.xlu0 %835
  %837 = vadd.xlane.f32.xlu0 %v806
  %v838 = vpop.xlane.xlu0 %837
  %v839 = vrcp.pop %v808
  %v840 = vrcp.pop %v810
  %v841 = vrcp.pop %v812
  %v842 = vrcp.pop %v814
  %v843 = vrcp.pop %v816
  %v844 = vrcp.pop %v818
  %v845 = vrcp.pop %v820
  %v846 = vrcp.pop %v822
  %v847 = vrcp.pop %v824
  %v848 = vrcp.pop %v826
  %v849 = vrcp.pop %v828
  %v850 = vrcp.pop %v830
  %v851 = vrcp.pop %v832
  %v852 = vrcp.pop %v834
  %v853 = vrcp.pop %v836
  %v854 = vrcp.pop %v838
  %v855 = vmul.f32 %v776, %v839
  %v856 = vmul.f32 %v778, %v840
  %v857 = vmul.f32 %v780, %v841
  %v858 = vmul.f32 %v782, %v842
  %v859 = vmul.f32 %v784, %v843
  %v860 = vmul.f32 %v786, %v844
  %v861 = vmul.f32 %v788, %v845
  %v862 = vmul.f32 %v790, %v846
  %v863 = vmul.f32 %v792, %v847
  %v864 = vmul.f32 %v794, %v848
  %v865 = vmul.f32 %v796, %v849
  %v866 = vmul.f32 %v798, %v850
  %v867 = vmul.f32 %v800, %v851
  %v868 = vmul.f32 %v802, %v852
  %v869 = vmul.f32 %v804, %v853
  %v870 = vmul.f32 %v806, %v854
  %v871 = vpack.c.bf16 %v856, %v855
  %v872 = vpack.c.bf16 %v858, %v857
  %v873 = vpack.c.bf16 %v860, %v859
  %v874 = vpack.c.bf16 %v862, %v861
  %v875 = vpack.c.bf16 %v864, %v863
  %v876 = vpack.c.bf16 %v866, %v865
  %v877 = vpack.c.bf16 %v868, %v867
  %v878 = vpack.c.bf16 %v870, %v869
  %879 = vrot.lane.b32.xlu0 %v549, 64
  %v880 = vpop.permute.xlu0 %879
  %881 = vrot.lane.b32.xlu0 %v550, 64
  %v882 = vpop.permute.xlu0 %881
  %883 = vrot.lane.b32.xlu0 %v551, 64
  %v884 = vpop.permute.xlu0 %883
  %885 = vrot.lane.b32.xlu0 %v552, 64
  %v886 = vpop.permute.xlu0 %885
  %887 = vrot.lane.b32.xlu0 %v553, 64
  %v888 = vpop.permute.xlu0 %887
  %889 = vrot.lane.b32.xlu0 %v554, 64
  %v890 = vpop.permute.xlu0 %889
  %891 = vrot.lane.b32.xlu0 %v555, 64
  %v892 = vpop.permute.xlu0 %891
  %893 = vrot.lane.b32.xlu0 %v556, 64
  %v894 = vpop.permute.xlu0 %893
  %903 = vmatprep.subr.bf16.mxu0 0
  %904 = vmatpush1.bf16.msra.mxu0 %v880
  %905 = vmatprep.subr.bf16.mxu0 0
  %906 = vmatpush1.bf16.msra.mxu0 %v882
  %907 = vmatprep.subr.bf16.mxu0 0
  %908 = vmatpush1.bf16.msra.mxu0 %v884
  %909 = vmatprep.subr.bf16.mxu0 0
  %910 = vmatpush1.bf16.msra.mxu0 %v886
  %911 = vmatprep.subr.bf16.mxu0 0
  %912 = vmatpush1.bf16.msra.mxu0 %v888
  %913 = vmatprep.subr.bf16.mxu0 0
  %914 = vmatpush1.bf16.msra.mxu0 %v890
  %915 = vmatprep.subr.bf16.mxu0 0
  %916 = vmatpush1.bf16.msra.mxu0 %v892
  %917 = vmatprep.subr.bf16.mxu0 0
  %918 = vmatpush1.bf16.msra.mxu0 %v894
  %919 = vmatprep.subr.bf16.mxu0 0
  %920 = vmatpush1.bf16.msra.mxu0 0
  %921 = vmatprep.subr.bf16.mxu0 0
  %922 = vmatpush1.bf16.msra.mxu0 0
  %923 = vmatprep.subr.bf16.mxu0 0
  %924 = vmatpush1.bf16.msra.mxu0 0
  %925 = vmatprep.subr.bf16.mxu0 0
  %926 = vmatpush1.bf16.msra.mxu0 0
  %927 = vmatprep.subr.bf16.mxu0 0
  %928 = vmatpush1.bf16.msra.mxu0 0
  %929 = vmatprep.subr.bf16.mxu0 0
  %930 = vmatpush1.bf16.msra.mxu0 0
  %931 = vmatprep.subr.bf16.mxu0 0
  %932 = vmatpush1.bf16.msra.mxu0 0
  %933 = vmatprep.subr.bf16.mxu0 0
  %934 = vmatpush1.bf16.msra.mxu0 0
  %935 = vmatprep.mubr.bf16.mxu0 0
  %936 = vmatmul.mubr.bf16.gmra.mrb[0].mxu0 %v871
  %v937 = vpop.f32.mrb[0].mxu0
  %v938 = vadd.f32 0.0, %v937
  %v939 = vpop.f32.mrb[0].mxu0
  %v940 = vpop.f32.mrb[0].mxu0
  %v941 = vadd.f32 0.0, %v940
  %v942 = vpop.f32.mrb[0].mxu0
  %943 = vmatprep.mubr.bf16.mxu0 0
  %944 = vmatmul.mubr.bf16.gmra.mrb[0].mxu0 %v872
  %v945 = vpop.f32.mrb[0].mxu0
  %v946 = vadd.f32 0.0, %v945
  %v947 = vpop.f32.mrb[0].mxu0
  %v948 = vpop.f32.mrb[0].mxu0
  %v949 = vadd.f32 0.0, %v948
  %v950 = vpop.f32.mrb[0].mxu0
  %951 = vmatprep.mubr.bf16.mxu0 0
  %952 = vmatmul.mubr.bf16.gmra.mrb[0].mxu0 %v873
  %v953 = vpop.f32.mrb[0].mxu0
  %v954 = vadd.f32 0.0, %v953
  %v955 = vpop.f32.mrb[0].mxu0
  %v956 = vpop.f32.mrb[0].mxu0
  %v957 = vadd.f32 0.0, %v956
  %v958 = vpop.f32.mrb[0].mxu0
  %959 = vmatprep.mubr.bf16.mxu0 0
  %960 = vmatmul.mubr.bf16.gmra.mrb[0].mxu0 %v874
  %v961 = vpop.f32.mrb[0].mxu0
  %v962 = vadd.f32 0.0, %v961
  %v963 = vpop.f32.mrb[0].mxu0
  %v964 = vpop.f32.mrb[0].mxu0
  %v965 = vadd.f32 0.0, %v964
  %v966 = vpop.f32.mrb[0].mxu0
  %967 = vmatprep.mubr.bf16.mxu0 0
  %968 = vmatmul.mubr.bf16.gmra.mrb[0].mxu0 %v875
  %v969 = vpop.f32.mrb[0].mxu0
  %v970 = vadd.f32 0.0, %v969
  %v971 = vpop.f32.mrb[0].mxu0
  %v972 = vpop.f32.mrb[0].mxu0
  %v973 = vadd.f32 0.0, %v972
  %v974 = vpop.f32.mrb[0].mxu0
  %975 = vmatprep.mubr.bf16.mxu0 0
  %976 = vmatmul.mubr.bf16.gmra.mrb[0].mxu0 %v876
  %v977 = vpop.f32.mrb[0].mxu0
  %v978 = vadd.f32 0.0, %v977
  %v979 = vpop.f32.mrb[0].mxu0
  %v980 = vpop.f32.mrb[0].mxu0
  %v981 = vadd.f32 0.0, %v980
  %v982 = vpop.f32.mrb[0].mxu0
  %983 = vmatprep.mubr.bf16.mxu0 0
  %984 = vmatmul.mubr.bf16.gmra.mrb[0].mxu0 %v877
  %v985 = vpop.f32.mrb[0].mxu0
  %v986 = vadd.f32 0.0, %v985
  %v987 = vpop.f32.mrb[0].mxu0
  %v988 = vpop.f32.mrb[0].mxu0
  %v989 = vadd.f32 0.0, %v988
  %v990 = vpop.f32.mrb[0].mxu0
  %991 = vmatprep.mubr.bf16.mxu0 0
  %992 = vmatmul.mubr.bf16.gmra.mrb[0].mxu0 %v878
  %v993 = vpop.f32.mrb[0].mxu0
  %v994 = vadd.f32 0.0, %v993
  %v995 = vpop.f32.mrb[0].mxu0
  %v996 = vpop.f32.mrb[0].mxu0
  %v997 = vadd.f32 0.0, %v996
  %v998 = vpop.f32.mrb[0].mxu0
  %999 = vdwg.mxu0
  %v1000 = vld [vmem:[%s3 + $0x10] sm:$0xf]
  %v1001 = vld [vmem:[%s3 + $0x14] sm:$0xf]
  %v1002 = vpack.c.bf16 %v941, %v938
  %v1003 = vpack.c.bf16 %v949, %v946
  %v1004 = vpack.c.bf16 %v957, %v954
  %v1005 = vpack.c.bf16 %v965, %v962
  %v1006 = vpack.c.bf16 %v973, %v970
  %v1007 = vpack.c.bf16 %v981, %v978
  %v1008 = vpack.c.bf16 %v989, %v986
  %v1009 = vpack.c.bf16 %v997, %v994
  %v1012 = vunpack.c.l.b16 %v1000
  %v1013 = vunpack.c.l.b16 %v1001
  %v1014 = vpack.c.b16 %v1013, %v1012
  %v1017 = vsel %vm581, %v1002, 0
  %v1020 = vsel %vm581, %v1003, 0
  %v1023 = vsel %vm581, %v1004, 0
  %v1026 = vsel %vm581, %v1005, 0
  %v1029 = vsel %vm581, %v1006, 0
  %v1032 = vsel %vm581, %v1007, 0
  %v1035 = vsel %vm581, %v1008, 0
  %v1038 = vsel %vm581, %v1009, 0
  %1040 = vmatprep.subr.bf16.mxu0 0
  %1041 = vmatpush1.bf16.msra.mxu0 %v1014
  %1042 = vmatprep.subr.bf16.mxu0 0
  %1043 = vmatpush1.bf16.msra.mxu0 0
  %1044 = vmatprep.subr.bf16.mxu0 0
  %1045 = vmatpush1.bf16.msra.mxu0 0
  %1046 = vmatprep.subr.bf16.mxu0 0
  %1047 = vmatpush1.bf16.msra.mxu0 0
  %1048 = vmatprep.subr.bf16.mxu0 0
  %1049 = vmatpush1.bf16.msra.mxu0 0
  %1050 = vmatprep.subr.bf16.mxu0 0
  %1051 = vmatpush1.bf16.msra.mxu0 0
  %1052 = vmatprep.subr.bf16.mxu0 0
  %1053 = vmatpush1.bf16.msra.mxu0 0
  %1054 = vmatprep.subr.bf16.mxu0 0
  %1055 = vmatpush1.bf16.msra.mxu0 0
  %1056 = vmatprep.subr.bf16.mxu0 0
  %1057 = vmatpush1.bf16.msra.mxu0 0
  %1058 = vmatprep.subr.bf16.mxu0 0
  %1059 = vmatpush1.bf16.msra.mxu0 0
  %1060 = vmatprep.subr.bf16.mxu0 0
  %1061 = vmatpush1.bf16.msra.mxu0 0
  %1062 = vmatprep.subr.bf16.mxu0 0
  %1063 = vmatpush1.bf16.msra.mxu0 0
  %1064 = vmatprep.subr.bf16.mxu0 0
  %1065 = vmatpush1.bf16.msra.mxu0 0
  %1066 = vmatprep.subr.bf16.mxu0 0
  %1067 = vmatpush1.bf16.msra.mxu0 0
  %1068 = vmatprep.subr.bf16.mxu0 0
  %1069 = vmatpush1.bf16.msra.mxu0 0
  %1070 = vmatprep.subr.bf16.mxu0 0
  %1071 = vmatpush1.bf16.msra.mxu0 0
  %1072 = vmatprep.mubr.bf16.mxu0 0
  %1073 = vmatmul.mubr.bf16.gmra.mrb[0].mxu0 %v1017
  %v1074 = vpop.f32.mrb[0].mxu0
  %v1075 = vadd.f32 0.0, %v1074
  %v1076 = vpop.f32.mrb[0].mxu0
  %v1077 = vpop.f32.mrb[0].mxu0
  %v1078 = vadd.f32 0.0, %v1077
  %v1079 = vpop.f32.mrb[0].mxu0
  %1080 = vmatprep.mubr.bf16.mxu0 0
  %1081 = vmatmul.mubr.bf16.gmra.mrb[0].mxu0 %v1020
  %v1082 = vpop.f32.mrb[0].mxu0
  %v1083 = vadd.f32 0.0, %v1082
  %v1084 = vpop.f32.mrb[0].mxu0
  %v1085 = vpop.f32.mrb[0].mxu0
  %v1086 = vadd.f32 0.0, %v1085
  %v1087 = vpop.f32.mrb[0].mxu0
  %1088 = vmatprep.mubr.bf16.mxu0 0
  %1089 = vmatmul.mubr.bf16.gmra.mrb[0].mxu0 %v1023
  %v1090 = vpop.f32.mrb[0].mxu0
  %v1091 = vadd.f32 0.0, %v1090
  %v1092 = vpop.f32.mrb[0].mxu0
  %v1093 = vpop.f32.mrb[0].mxu0
  %v1094 = vadd.f32 0.0, %v1093
  %v1095 = vpop.f32.mrb[0].mxu0
  %1096 = vmatprep.mubr.bf16.mxu0 0
  %1097 = vmatmul.mubr.bf16.gmra.mrb[0].mxu0 %v1026
  %v1098 = vpop.f32.mrb[0].mxu0
  %v1099 = vadd.f32 0.0, %v1098
  %v1100 = vpop.f32.mrb[0].mxu0
  %v1101 = vpop.f32.mrb[0].mxu0
  %v1102 = vadd.f32 0.0, %v1101
  %v1103 = vpop.f32.mrb[0].mxu0
  %1104 = vmatprep.mubr.bf16.mxu0 0
  %1105 = vmatmul.mubr.bf16.gmra.mrb[0].mxu0 %v1029
  %v1106 = vpop.f32.mrb[0].mxu0
  %v1107 = vadd.f32 0.0, %v1106
  %v1108 = vpop.f32.mrb[0].mxu0
  %v1109 = vpop.f32.mrb[0].mxu0
  %v1110 = vadd.f32 0.0, %v1109
  %v1111 = vpop.f32.mrb[0].mxu0
  %1112 = vmatprep.mubr.bf16.mxu0 0
  %1113 = vmatmul.mubr.bf16.gmra.mrb[0].mxu0 %v1032
  %v1114 = vpop.f32.mrb[0].mxu0
  %v1115 = vadd.f32 0.0, %v1114
  %v1116 = vpop.f32.mrb[0].mxu0
  %v1117 = vpop.f32.mrb[0].mxu0
  %v1118 = vadd.f32 0.0, %v1117
  %v1119 = vpop.f32.mrb[0].mxu0
  %1120 = vmatprep.mubr.bf16.mxu0 0
  %1121 = vmatmul.mubr.bf16.gmra.mrb[0].mxu0 %v1035
  %v1122 = vpop.f32.mrb[0].mxu0
  %v1123 = vadd.f32 0.0, %v1122
  %v1124 = vpop.f32.mrb[0].mxu0
  %v1125 = vpop.f32.mrb[0].mxu0
  %v1126 = vadd.f32 0.0, %v1125
  %v1127 = vpop.f32.mrb[0].mxu0
  %1128 = vmatprep.mubr.bf16.mxu0 0
  %1129 = vmatmul.mubr.bf16.gmra.mrb[0].mxu0 %v1038
  %v1130 = vpop.f32.mrb[0].mxu0
  %v1131 = vadd.f32 0.0, %v1130
  %v1132 = vpop.f32.mrb[0].mxu0
  %v1133 = vpop.f32.mrb[0].mxu0
  %v1134 = vadd.f32 0.0, %v1133
  %v1135 = vpop.f32.mrb[0].mxu0
  %1136 = vdwg.mxu0
  %v1137 = vlaneseq
  %v1138 = vshrl.u32 %v1137, 7
  %v1139 = vsub.s32 0, %v1138
  %v1140 = vrot.slane %v58, %v1139
  %v1141 = vadd.f32 %v1140, %v1075
  %v1142 = vadd.f32 %v1140, %v1078
  %v1143 = vadd.f32 %v1140, %v1083
  %v1144 = vadd.f32 %v1140, %v1086
  %v1145 = vadd.f32 %v1140, %v1091
  %v1146 = vadd.f32 %v1140, %v1094
  %v1147 = vadd.f32 %v1140, %v1099
  %v1148 = vadd.f32 %v1140, %v1102
  %v1149 = vadd.f32 %v1140, %v1107
  %v1150 = vadd.f32 %v1140, %v1110
  %v1151 = vadd.f32 %v1140, %v1115
  %v1152 = vadd.f32 %v1140, %v1118
  %v1153 = vadd.f32 %v1140, %v1123
  %v1154 = vadd.f32 %v1140, %v1126
  %v1155 = vadd.f32 %v1140, %v1131
  %v1156 = vadd.f32 %v1140, %v1134
  %1157 = vrot.lane.b32.xlu0 %v549, 112
  %v1158 = vpop.permute.xlu0 %1157
  %1159 = vrot.lane.b32.xlu0 %v550, 112
  %v1160 = vpop.permute.xlu0 %1159
  %1161 = vrot.lane.b32.xlu0 %v551, 112
  %v1162 = vpop.permute.xlu0 %1161
  %1163 = vrot.lane.b32.xlu0 %v552, 112
  %v1164 = vpop.permute.xlu0 %1163
  %1165 = vrot.lane.b32.xlu0 %v553, 112
  %v1166 = vpop.permute.xlu0 %1165
  %1167 = vrot.lane.b32.xlu0 %v554, 112
  %v1168 = vpop.permute.xlu0 %1167
  %1169 = vrot.lane.b32.xlu0 %v555, 112
  %v1170 = vpop.permute.xlu0 %1169
  %1171 = vrot.lane.b32.xlu0 %v556, 112
  %v1172 = vpop.permute.xlu0 %1171
  %1173 = vrot.lane.b32.xlu0 %v549, 80
  %v1174 = vpop.permute.xlu0 %1173
  %1175 = vrot.lane.b32.xlu0 %v550, 80
  %v1176 = vpop.permute.xlu0 %1175
  %1177 = vrot.lane.b32.xlu0 %v551, 80
  %v1178 = vpop.permute.xlu0 %1177
  %1179 = vrot.lane.b32.xlu0 %v552, 80
  %v1180 = vpop.permute.xlu0 %1179
  %1181 = vrot.lane.b32.xlu0 %v553, 80
  %v1182 = vpop.permute.xlu0 %1181
  %1183 = vrot.lane.b32.xlu0 %v554, 80
  %v1184 = vpop.permute.xlu0 %1183
  %1185 = vrot.lane.b32.xlu0 %v555, 80
  %v1186 = vpop.permute.xlu0 %1185
  %1187 = vrot.lane.b32.xlu0 %v556, 80
  %v1188 = vpop.permute.xlu0 %1187
  %v1190 = vsel %vm581, %v1158, 0
  %v1193 = vsel %vm581, %v1160, 0
  %v1196 = vsel %vm581, %v1162, 0
  %v1199 = vsel %vm581, %v1164, 0
  %v1202 = vsel %vm581, %v1166, 0
  %v1205 = vsel %vm581, %v1168, 0
  %v1208 = vsel %vm581, %v1170, 0
  %v1211 = vsel %vm581, %v1172, 0
  %v1214 = vsel %vm581, %v1174, 0
  %v1217 = vsel %vm581, %v1176, 0
  %v1220 = vsel %vm581, %v1178, 0
  %v1223 = vsel %vm581, %v1180, 0
  %v1226 = vsel %vm581, %v1182, 0
  %v1229 = vsel %vm581, %v1184, 0
  %v1232 = vsel %vm581, %v1186, 0
  %v1235 = vsel %vm581, %v1188, 0
  %1237 = vmatprep.subr.bf16.mxu0 0
  %1238 = vmatpush1.bf16.xpose.msra.mxu0 %v1214
  %1239 = vmatprep.subr.bf16.mxu0 0
  %1240 = vmatpush1.bf16.xpose.msra.mxu0 %v1217
  %1241 = vmatprep.subr.bf16.mxu0 0
  %1242 = vmatpush1.bf16.xpose.msra.mxu0 %v1220
  %1243 = vmatprep.subr.bf16.mxu0 0
  %1244 = vmatpush1.bf16.xpose.msra.mxu0 %v1223
  %1245 = vmatprep.subr.bf16.mxu0 0
  %1246 = vmatpush1.bf16.xpose.msra.mxu0 %v1226
  %1247 = vmatprep.subr.bf16.mxu0 0
  %1248 = vmatpush1.bf16.xpose.msra.mxu0 %v1229
  %1249 = vmatprep.subr.bf16.mxu0 0
  %1250 = vmatpush1.bf16.xpose.msra.mxu0 %v1232
  %1251 = vmatprep.subr.bf16.mxu0 0
  %1252 = vmatpush1.bf16.xpose.msra.mxu0 %v1235
  %1253 = vmatprep.subr.bf16.mxu0 0
  %1254 = vmatpush1.bf16.xpose.msra.mxu0 0
  %1255 = vmatprep.subr.bf16.mxu0 0
  %1256 = vmatpush1.bf16.xpose.msra.mxu0 0
  %1257 = vmatprep.subr.bf16.mxu0 0
  %1258 = vmatpush1.bf16.xpose.msra.mxu0 0
  %1259 = vmatprep.subr.bf16.mxu0 0
  %1260 = vmatpush1.bf16.xpose.msra.mxu0 0
  %1261 = vmatprep.subr.bf16.mxu0 0
  %1262 = vmatpush1.bf16.xpose.msra.mxu0 0
  %1263 = vmatprep.subr.bf16.mxu0 0
  %1264 = vmatpush1.bf16.xpose.msra.mxu0 0
  %1265 = vmatprep.subr.bf16.mxu0 0
  %1266 = vmatpush1.bf16.xpose.msra.mxu0 0
  %1267 = vmatprep.subr.bf16.mxu0 0
  %1268 = vmatpush1.bf16.xpose.msra.mxu0 0
  %1269 = vmatprep.mubr.bf16.mxu0 0
  %1270 = vmatmul.mubr.bf16.gmra.mrb[0].mxu0 %v1190
  %v1271 = vpop.f32.mrb[0].mxu0
  %v1272 = vadd.f32 %v533, %v1271
  %v1273 = vpop.f32.mrb[0].mxu0
  %v1274 = vpop.f32.mrb[0].mxu0
  %v1275 = vadd.f32 %v534, %v1274
  %v1276 = vpop.f32.mrb[0].mxu0
  %1277 = vmatprep.mubr.bf16.mxu0 0
  %1278 = vmatmul.mubr.bf16.gmra.mrb[0].mxu0 %v1193
  %v1279 = vpop.f32.mrb[0].mxu0
  %v1280 = vadd.f32 %v535, %v1279
  %v1281 = vpop.f32.mrb[0].mxu0
  %v1282 = vpop.f32.mrb[0].mxu0
  %v1283 = vadd.f32 %v536, %v1282
  %v1284 = vpop.f32.mrb[0].mxu0
  %1285 = vmatprep.mubr.bf16.mxu0 0
  %1286 = vmatmul.mubr.bf16.gmra.mrb[0].mxu0 %v1196
  %v1287 = vpop.f32.mrb[0].mxu0
  %v1288 = vadd.f32 %v537, %v1287
  %v1289 = vpop.f32.mrb[0].mxu0
  %v1290 = vpop.f32.mrb[0].mxu0
  %v1291 = vadd.f32 %v538, %v1290
  %v1292 = vpop.f32.mrb[0].mxu0
  %1293 = vmatprep.mubr.bf16.mxu0 0
  %1294 = vmatmul.mubr.bf16.gmra.mrb[0].mxu0 %v1199
  %v1295 = vpop.f32.mrb[0].mxu0
  %v1296 = vadd.f32 %v539, %v1295
  %v1297 = vpop.f32.mrb[0].mxu0
  %v1298 = vpop.f32.mrb[0].mxu0
  %v1299 = vadd.f32 %v540, %v1298
  %v1300 = vpop.f32.mrb[0].mxu0
  %1301 = vmatprep.mubr.bf16.mxu0 0
  %1302 = vmatmul.mubr.bf16.gmra.mrb[0].mxu0 %v1202
  %v1303 = vpop.f32.mrb[0].mxu0
  %v1304 = vadd.f32 %v541, %v1303
  %v1305 = vpop.f32.mrb[0].mxu0
  %v1306 = vpop.f32.mrb[0].mxu0
  %v1307 = vadd.f32 %v542, %v1306
  %v1308 = vpop.f32.mrb[0].mxu0
  %1309 = vmatprep.mubr.bf16.mxu0 0
  %1310 = vmatmul.mubr.bf16.gmra.mrb[0].mxu0 %v1205
  %v1311 = vpop.f32.mrb[0].mxu0
  %v1312 = vadd.f32 %v543, %v1311
  %v1313 = vpop.f32.mrb[0].mxu0
  %v1314 = vpop.f32.mrb[0].mxu0
  %v1315 = vadd.f32 %v544, %v1314
  %v1316 = vpop.f32.mrb[0].mxu0
  %1317 = vmatprep.mubr.bf16.mxu0 0
  %1318 = vmatmul.mubr.bf16.gmra.mrb[0].mxu0 %v1208
  %v1319 = vpop.f32.mrb[0].mxu0
  %v1320 = vadd.f32 %v545, %v1319
  %v1321 = vpop.f32.mrb[0].mxu0
  %v1322 = vpop.f32.mrb[0].mxu0
  %v1323 = vadd.f32 %v546, %v1322
  %v1324 = vpop.f32.mrb[0].mxu0
  %1325 = vmatprep.mubr.bf16.mxu0 0
  %1326 = vmatmul.mubr.bf16.gmra.mrb[0].mxu0 %v1211
  %v1327 = vpop.f32.mrb[0].mxu0
  %v1328 = vadd.f32 %v547, %v1327
  %v1329 = vpop.f32.mrb[0].mxu0
  %v1330 = vpop.f32.mrb[0].mxu0
  %v1331 = vadd.f32 %v548, %v1330
  %v1332 = vpop.f32.mrb[0].mxu0
  %1333 = vdwg.mxu0
  %1334 = vmax.xlane.f32.xlu0 %v1272
  %v1335 = vpop.xlane.xlu0 %1334
  %1336 = vmax.xlane.f32.xlu0 %v1275
  %v1337 = vpop.xlane.xlu0 %1336
  %1338 = vmax.xlane.f32.xlu0 %v1280
  %v1339 = vpop.xlane.xlu0 %1338
  %1340 = vmax.xlane.f32.xlu0 %v1283
  %v1341 = vpop.xlane.xlu0 %1340
  %1342 = vmax.xlane.f32.xlu0 %v1288
  %v1343 = vpop.xlane.xlu0 %1342
  %1344 = vmax.xlane.f32.xlu0 %v1291
  %v1345 = vpop.xlane.xlu0 %1344
  %1346 = vmax.xlane.f32.xlu0 %v1296
  %v1347 = vpop.xlane.xlu0 %1346
  %1348 = vmax.xlane.f32.xlu0 %v1299
  %v1349 = vpop.xlane.xlu0 %1348
  %1350 = vmax.xlane.f32.xlu0 %v1304
  %v1351 = vpop.xlane.xlu0 %1350
  %1352 = vmax.xlane.f32.xlu0 %v1307
  %v1353 = vpop.xlane.xlu0 %1352
  %1354 = vmax.xlane.f32.xlu0 %v1312
  %v1355 = vpop.xlane.xlu0 %1354
  %1356 = vmax.xlane.f32.xlu0 %v1315
  %v1357 = vpop.xlane.xlu0 %1356
  %1358 = vmax.xlane.f32.xlu0 %v1320
  %v1359 = vpop.xlane.xlu0 %1358
  %1360 = vmax.xlane.f32.xlu0 %v1323
  %v1361 = vpop.xlane.xlu0 %1360
  %1362 = vmax.xlane.f32.xlu0 %v1328
  %v1363 = vpop.xlane.xlu0 %1362
  %1364 = vmax.xlane.f32.xlu0 %v1331
  %v1365 = vpop.xlane.xlu0 %1364
  %v1366 = vsub.f32 %v1272, %v1335
  %v1367 = vsub.f32 %v1275, %v1337
  %v1368 = vsub.f32 %v1280, %v1339
  %v1369 = vsub.f32 %v1283, %v1341
  %v1370 = vsub.f32 %v1288, %v1343
  %v1371 = vsub.f32 %v1291, %v1345
  %v1372 = vsub.f32 %v1296, %v1347
  %v1373 = vsub.f32 %v1299, %v1349
  %v1374 = vsub.f32 %v1304, %v1351
  %v1375 = vsub.f32 %v1307, %v1353
  %v1376 = vsub.f32 %v1312, %v1355
  %v1377 = vsub.f32 %v1315, %v1357
  %v1378 = vsub.f32 %v1320, %v1359
  %v1379 = vsub.f32 %v1323, %v1361
  %v1380 = vsub.f32 %v1328, %v1363
  %v1381 = vsub.f32 %v1331, %v1365
  %v1382 = vmul.f32 %v1366, 1.442695
  %v1383 = vpow.pop %v1382
  %v1384 = vmul.f32 %v1367, 1.442695
  %v1385 = vpow.pop %v1384
  %v1386 = vmul.f32 %v1368, 1.442695
  %v1387 = vpow.pop %v1386
  %v1388 = vmul.f32 %v1369, 1.442695
  %v1389 = vpow.pop %v1388
  %v1390 = vmul.f32 %v1370, 1.442695
  %v1391 = vpow.pop %v1390
  %v1392 = vmul.f32 %v1371, 1.442695
  %v1393 = vpow.pop %v1392
  %v1394 = vmul.f32 %v1372, 1.442695
  %v1395 = vpow.pop %v1394
  %v1396 = vmul.f32 %v1373, 1.442695
  %v1397 = vpow.pop %v1396
  %v1398 = vmul.f32 %v1374, 1.442695
  %v1399 = vpow.pop %v1398
  %v1400 = vmul.f32 %v1375, 1.442695
  %v1401 = vpow.pop %v1400
  %v1402 = vmul.f32 %v1376, 1.442695
  %v1403 = vpow.pop %v1402
  %v1404 = vmul.f32 %v1377, 1.442695
  %v1405 = vpow.pop %v1404
  %v1406 = vmul.f32 %v1378, 1.442695
  %v1407 = vpow.pop %v1406
  %v1408 = vmul.f32 %v1379, 1.442695
  %v1409 = vpow.pop %v1408
  %v1410 = vmul.f32 %v1380, 1.442695
  %v1411 = vpow.pop %v1410
  %v1412 = vmul.f32 %v1381, 1.442695
  %v1413 = vpow.pop %v1412
  %1414 = vadd.xlane.f32.xlu0 %v1383
  %v1415 = vpop.xlane.xlu0 %1414
  %1416 = vadd.xlane.f32.xlu0 %v1385
  %v1417 = vpop.xlane.xlu0 %1416
  %1418 = vadd.xlane.f32.xlu0 %v1387
  %v1419 = vpop.xlane.xlu0 %1418
  %1420 = vadd.xlane.f32.xlu0 %v1389
  %v1421 = vpop.xlane.xlu0 %1420
  %1422 = vadd.xlane.f32.xlu0 %v1391
  %v1423 = vpop.xlane.xlu0 %1422
  %1424 = vadd.xlane.f32.xlu0 %v1393
  %v1425 = vpop.xlane.xlu0 %1424
  %1426 = vadd.xlane.f32.xlu0 %v1395
  %v1427 = vpop.xlane.xlu0 %1426
  %1428 = vadd.xlane.f32.xlu0 %v1397
  %v1429 = vpop.xlane.xlu0 %1428
  %1430 = vadd.xlane.f32.xlu0 %v1399
  %v1431 = vpop.xlane.xlu0 %1430
  %1432 = vadd.xlane.f32.xlu0 %v1401
  %v1433 = vpop.xlane.xlu0 %1432
  %1434 = vadd.xlane.f32.xlu0 %v1403
  %v1435 = vpop.xlane.xlu0 %1434
  %1436 = vadd.xlane.f32.xlu0 %v1405
  %v1437 = vpop.xlane.xlu0 %1436
  %1438 = vadd.xlane.f32.xlu0 %v1407
  %v1439 = vpop.xlane.xlu0 %1438
  %1440 = vadd.xlane.f32.xlu0 %v1409
  %v1441 = vpop.xlane.xlu0 %1440
  %1442 = vadd.xlane.f32.xlu0 %v1411
  %v1443 = vpop.xlane.xlu0 %1442
  %1444 = vadd.xlane.f32.xlu0 %v1413
  %v1445 = vpop.xlane.xlu0 %1444
  %v1446 = vrcp.pop %v1415
  %v1447 = vrcp.pop %v1417
  %v1448 = vrcp.pop %v1419
  %v1449 = vrcp.pop %v1421
  %v1450 = vrcp.pop %v1423
  %v1451 = vrcp.pop %v1425
  %v1452 = vrcp.pop %v1427
  %v1453 = vrcp.pop %v1429
  %v1454 = vrcp.pop %v1431
  %v1455 = vrcp.pop %v1433
  %v1456 = vrcp.pop %v1435
  %v1457 = vrcp.pop %v1437
  %v1458 = vrcp.pop %v1439
  %v1459 = vrcp.pop %v1441
  %v1460 = vrcp.pop %v1443
  %v1461 = vrcp.pop %v1445
  %v1462 = vmul.f32 %v1383, %v1446
  %v1463 = vmul.f32 %v1385, %v1447
  %v1464 = vmul.f32 %v1387, %v1448
  %v1465 = vmul.f32 %v1389, %v1449
  %v1466 = vmul.f32 %v1391, %v1450
  %v1467 = vmul.f32 %v1393, %v1451
  %v1468 = vmul.f32 %v1395, %v1452
  %v1469 = vmul.f32 %v1397, %v1453
  %v1470 = vmul.f32 %v1399, %v1454
  %v1471 = vmul.f32 %v1401, %v1455
  %v1472 = vmul.f32 %v1403, %v1456
  %v1473 = vmul.f32 %v1405, %v1457
  %v1474 = vmul.f32 %v1407, %v1458
  %v1475 = vmul.f32 %v1409, %v1459
  %v1476 = vmul.f32 %v1411, %v1460
  %v1477 = vmul.f32 %v1413, %v1461
  %v1478 = vpack.c.bf16 %v1463, %v1462
  %v1479 = vpack.c.bf16 %v1465, %v1464
  %v1480 = vpack.c.bf16 %v1467, %v1466
  %v1481 = vpack.c.bf16 %v1469, %v1468
  %v1482 = vpack.c.bf16 %v1471, %v1470
  %v1483 = vpack.c.bf16 %v1473, %v1472
  %v1484 = vpack.c.bf16 %v1475, %v1474
  %v1485 = vpack.c.bf16 %v1477, %v1476
  %1486 = vrot.lane.b32.xlu0 %v549, 48
  %v1487 = vpop.permute.xlu0 %1486
  %1488 = vrot.lane.b32.xlu0 %v550, 48
  %v1489 = vpop.permute.xlu0 %1488
  %1490 = vrot.lane.b32.xlu0 %v551, 48
  %v1491 = vpop.permute.xlu0 %1490
  %1492 = vrot.lane.b32.xlu0 %v552, 48
  %v1493 = vpop.permute.xlu0 %1492
  %1494 = vrot.lane.b32.xlu0 %v553, 48
  %v1495 = vpop.permute.xlu0 %1494
  %1496 = vrot.lane.b32.xlu0 %v554, 48
  %v1497 = vpop.permute.xlu0 %1496
  %1498 = vrot.lane.b32.xlu0 %v555, 48
  %v1499 = vpop.permute.xlu0 %1498
  %1500 = vrot.lane.b32.xlu0 %v556, 48
  %v1501 = vpop.permute.xlu0 %1500
  %1510 = vmatprep.subr.bf16.mxu0 0
  %1511 = vmatpush1.bf16.msra.mxu0 %v1487
  %1512 = vmatprep.subr.bf16.mxu0 0
  %1513 = vmatpush1.bf16.msra.mxu0 %v1489
  %1514 = vmatprep.subr.bf16.mxu0 0
  %1515 = vmatpush1.bf16.msra.mxu0 %v1491
  %1516 = vmatprep.subr.bf16.mxu0 0
  %1517 = vmatpush1.bf16.msra.mxu0 %v1493
  %1518 = vmatprep.subr.bf16.mxu0 0
  %1519 = vmatpush1.bf16.msra.mxu0 %v1495
  %1520 = vmatprep.subr.bf16.mxu0 0
  %1521 = vmatpush1.bf16.msra.mxu0 %v1497
  %1522 = vmatprep.subr.bf16.mxu0 0
  %1523 = vmatpush1.bf16.msra.mxu0 %v1499
  %1524 = vmatprep.subr.bf16.mxu0 0
  %1525 = vmatpush1.bf16.msra.mxu0 %v1501
  %1526 = vmatprep.subr.bf16.mxu0 0
  %1527 = vmatpush1.bf16.msra.mxu0 0
  %1528 = vmatprep.subr.bf16.mxu0 0
  %1529 = vmatpush1.bf16.msra.mxu0 0
  %1530 = vmatprep.subr.bf16.mxu0 0
  %1531 = vmatpush1.bf16.msra.mxu0 0
  %1532 = vmatprep.subr.bf16.mxu0 0
  %1533 = vmatpush1.bf16.msra.mxu0 0
  %1534 = vmatprep.subr.bf16.mxu0 0
  %1535 = vmatpush1.bf16.msra.mxu0 0
  %1536 = vmatprep.subr.bf16.mxu0 0
  %1537 = vmatpush1.bf16.msra.mxu0 0
  %1538 = vmatprep.subr.bf16.mxu0 0
  %1539 = vmatpush1.bf16.msra.mxu0 0
  %1540 = vmatprep.subr.bf16.mxu0 0
  %1541 = vmatpush1.bf16.msra.mxu0 0
  %1542 = vmatprep.mubr.bf16.mxu0 0
  %1543 = vmatmul.mubr.bf16.gmra.mrb[0].mxu0 %v1478
  %v1544 = vpop.f32.mrb[0].mxu0
  %v1545 = vadd.f32 0.0, %v1544
  %v1546 = vpop.f32.mrb[0].mxu0
  %v1547 = vpop.f32.mrb[0].mxu0
  %v1548 = vadd.f32 0.0, %v1547
  %v1549 = vpop.f32.mrb[0].mxu0
  %1550 = vmatprep.mubr.bf16.mxu0 0
  %1551 = vmatmul.mubr.bf16.gmra.mrb[0].mxu0 %v1479
  %v1552 = vpop.f32.mrb[0].mxu0
  %v1553 = vadd.f32 0.0, %v1552
  %v1554 = vpop.f32.mrb[0].mxu0
  %v1555 = vpop.f32.mrb[0].mxu0
  %v1556 = vadd.f32 0.0, %v1555
  %v1557 = vpop.f32.mrb[0].mxu0
  %1558 = vmatprep.mubr.bf16.mxu0 0
  %1559 = vmatmul.mubr.bf16.gmra.mrb[0].mxu0 %v1480
  %v1560 = vpop.f32.mrb[0].mxu0
  %v1561 = vadd.f32 0.0, %v1560
  %v1562 = vpop.f32.mrb[0].mxu0
  %v1563 = vpop.f32.mrb[0].mxu0
  %v1564 = vadd.f32 0.0, %v1563
  %v1565 = vpop.f32.mrb[0].mxu0
  %1566 = vmatprep.mubr.bf16.mxu0 0
  %1567 = vmatmul.mubr.bf16.gmra.mrb[0].mxu0 %v1481
  %v1568 = vpop.f32.mrb[0].mxu0
  %v1569 = vadd.f32 0.0, %v1568
  %v1570 = vpop.f32.mrb[0].mxu0
  %v1571 = vpop.f32.mrb[0].mxu0
  %v1572 = vadd.f32 0.0, %v1571
  %v1573 = vpop.f32.mrb[0].mxu0
  %1574 = vmatprep.mubr.bf16.mxu0 0
  %1575 = vmatmul.mubr.bf16.gmra.mrb[0].mxu0 %v1482
  %v1576 = vpop.f32.mrb[0].mxu0
  %v1577 = vadd.f32 0.0, %v1576
  %v1578 = vpop.f32.mrb[0].mxu0
  %v1579 = vpop.f32.mrb[0].mxu0
  %v1580 = vadd.f32 0.0, %v1579
  %v1581 = vpop.f32.mrb[0].mxu0
  %1582 = vmatprep.mubr.bf16.mxu0 0
  %1583 = vmatmul.mubr.bf16.gmra.mrb[0].mxu0 %v1483
  %v1584 = vpop.f32.mrb[0].mxu0
  %v1585 = vadd.f32 0.0, %v1584
  %v1586 = vpop.f32.mrb[0].mxu0
  %v1587 = vpop.f32.mrb[0].mxu0
  %v1588 = vadd.f32 0.0, %v1587
  %v1589 = vpop.f32.mrb[0].mxu0
  %1590 = vmatprep.mubr.bf16.mxu0 0
  %1591 = vmatmul.mubr.bf16.gmra.mrb[0].mxu0 %v1484
  %v1592 = vpop.f32.mrb[0].mxu0
  %v1593 = vadd.f32 0.0, %v1592
  %v1594 = vpop.f32.mrb[0].mxu0
  %v1595 = vpop.f32.mrb[0].mxu0
  %v1596 = vadd.f32 0.0, %v1595
  %v1597 = vpop.f32.mrb[0].mxu0
  %1598 = vmatprep.mubr.bf16.mxu0 0
  %1599 = vmatmul.mubr.bf16.gmra.mrb[0].mxu0 %v1485
  %v1600 = vpop.f32.mrb[0].mxu0
  %v1601 = vadd.f32 0.0, %v1600
  %v1602 = vpop.f32.mrb[0].mxu0
  %v1603 = vpop.f32.mrb[0].mxu0
  %v1604 = vadd.f32 0.0, %v1603
  %v1605 = vpop.f32.mrb[0].mxu0
  %1606 = vdwg.mxu0
  %v1607 = vld [vmem:[%s3 + $0x18] sm:$0xf]
  %v1608 = vld [vmem:[%s3 + $0x1c] sm:$0xf]
  %v1609 = vpack.c.bf16 %v1548, %v1545
  %v1610 = vpack.c.bf16 %v1556, %v1553
  %v1611 = vpack.c.bf16 %v1564, %v1561
  %v1612 = vpack.c.bf16 %v1572, %v1569
  %v1613 = vpack.c.bf16 %v1580, %v1577
  %v1614 = vpack.c.bf16 %v1588, %v1585
  %v1615 = vpack.c.bf16 %v1596, %v1593
  %v1616 = vpack.c.bf16 %v1604, %v1601
  %v1619 = vunpack.c.l.b16 %v1607
  %v1620 = vunpack.c.l.b16 %v1608
  %v1621 = vpack.c.b16 %v1620, %v1619
  %v1624 = vsel %vm581, %v1609, 0
  %v1627 = vsel %vm581, %v1610, 0
  %v1630 = vsel %vm581, %v1611, 0
  %v1633 = vsel %vm581, %v1612, 0
  %v1636 = vsel %vm581, %v1613, 0
  %v1639 = vsel %vm581, %v1614, 0
  %v1642 = vsel %vm581, %v1615, 0
  %v1645 = vsel %vm581, %v1616, 0
  %1647 = vmatprep.subr.bf16.mxu0 0
  %1648 = vmatpush1.bf16.msra.mxu0 %v1621
  %1649 = vmatprep.subr.bf16.mxu0 0
  %1650 = vmatpush1.bf16.msra.mxu0 0
  %1651 = vmatprep.subr.bf16.mxu0 0
  %1652 = vmatpush1.bf16.msra.mxu0 0
  %1653 = vmatprep.subr.bf16.mxu0 0
  %1654 = vmatpush1.bf16.msra.mxu0 0
  %1655 = vmatprep.subr.bf16.mxu0 0
  %1656 = vmatpush1.bf16.msra.mxu0 0
  %1657 = vmatprep.subr.bf16.mxu0 0
  %1658 = vmatpush1.bf16.msra.mxu0 0
  %1659 = vmatprep.subr.bf16.mxu0 0
  %1660 = vmatpush1.bf16.msra.mxu0 0
  %1661 = vmatprep.subr.bf16.mxu0 0
  %1662 = vmatpush1.bf16.msra.mxu0 0
  %1663 = vmatprep.subr.bf16.mxu0 0
  %1664 = vmatpush1.bf16.msra.mxu0 0
  %1665 = vmatprep.subr.bf16.mxu0 0
  %1666 = vmatpush1.bf16.msra.mxu0 0
  %1667 = vmatprep.subr.bf16.mxu0 0
  %1668 = vmatpush1.bf16.msra.mxu0 0
  %1669 = vmatprep.subr.bf16.mxu0 0
  %1670 = vmatpush1.bf16.msra.mxu0 0
  %1671 = vmatprep.subr.bf16.mxu0 0
  %1672 = vmatpush1.bf16.msra.mxu0 0
  %1673 = vmatprep.subr.bf16.mxu0 0
  %1674 = vmatpush1.bf16.msra.mxu0 0
  %1675 = vmatprep.subr.bf16.mxu0 0
  %1676 = vmatpush1.bf16.msra.mxu0 0
  %1677 = vmatprep.subr.bf16.mxu0 0
  %1678 = vmatpush1.bf16.msra.mxu0 0
  %1679 = vmatprep.mubr.bf16.mxu0 0
  %1680 = vmatmul.mubr.bf16.gmra.mrb[0].mxu0 %v1624
  %v1681 = vpop.f32.mrb[0].mxu0
  %v1682 = vadd.f32 0.0, %v1681
  %v1683 = vpop.f32.mrb[0].mxu0
  %v1684 = vpop.f32.mrb[0].mxu0
  %v1685 = vadd.f32 0.0, %v1684
  %v1686 = vpop.f32.mrb[0].mxu0
  %1687 = vmatprep.mubr.bf16.mxu0 0
  %1688 = vmatmul.mubr.bf16.gmra.mrb[0].mxu0 %v1627
  %v1689 = vpop.f32.mrb[0].mxu0
  %v1690 = vadd.f32 0.0, %v1689
  %v1691 = vpop.f32.mrb[0].mxu0
  %v1692 = vpop.f32.mrb[0].mxu0
  %v1693 = vadd.f32 0.0, %v1692
  %v1694 = vpop.f32.mrb[0].mxu0
  %1695 = vmatprep.mubr.bf16.mxu0 0
  %1696 = vmatmul.mubr.bf16.gmra.mrb[0].mxu0 %v1630
  %v1697 = vpop.f32.mrb[0].mxu0
  %v1698 = vadd.f32 0.0, %v1697
  %v1699 = vpop.f32.mrb[0].mxu0
  %v1700 = vpop.f32.mrb[0].mxu0
  %v1701 = vadd.f32 0.0, %v1700
  %v1702 = vpop.f32.mrb[0].mxu0
  %1703 = vmatprep.mubr.bf16.mxu0 0
  %1704 = vmatmul.mubr.bf16.gmra.mrb[0].mxu0 %v1633
  %v1705 = vpop.f32.mrb[0].mxu0
  %v1706 = vadd.f32 0.0, %v1705
  %v1707 = vpop.f32.mrb[0].mxu0
  %v1708 = vpop.f32.mrb[0].mxu0
  %v1709 = vadd.f32 0.0, %v1708
  %v1710 = vpop.f32.mrb[0].mxu0
  %1711 = vmatprep.mubr.bf16.mxu0 0
  %1712 = vmatmul.mubr.bf16.gmra.mrb[0].mxu0 %v1636
  %v1713 = vpop.f32.mrb[0].mxu0
  %v1714 = vadd.f32 0.0, %v1713
  %v1715 = vpop.f32.mrb[0].mxu0
  %v1716 = vpop.f32.mrb[0].mxu0
  %v1717 = vadd.f32 0.0, %v1716
  %v1718 = vpop.f32.mrb[0].mxu0
  %1719 = vmatprep.mubr.bf16.mxu0 0
  %1720 = vmatmul.mubr.bf16.gmra.mrb[0].mxu0 %v1639
  %v1721 = vpop.f32.mrb[0].mxu0
  %v1722 = vadd.f32 0.0, %v1721
  %v1723 = vpop.f32.mrb[0].mxu0
  %v1724 = vpop.f32.mrb[0].mxu0
  %v1725 = vadd.f32 0.0, %v1724
  %v1726 = vpop.f32.mrb[0].mxu0
  %1727 = vmatprep.mubr.bf16.mxu0 0
  %1728 = vmatmul.mubr.bf16.gmra.mrb[0].mxu0 %v1642
  %v1729 = vpop.f32.mrb[0].mxu0
  %v1730 = vadd.f32 0.0, %v1729
  %v1731 = vpop.f32.mrb[0].mxu0
  %v1732 = vpop.f32.mrb[0].mxu0
  %v1733 = vadd.f32 0.0, %v1732
  %v1734 = vpop.f32.mrb[0].mxu0
  %1735 = vmatprep.mubr.bf16.mxu0 0
  %1736 = vmatmul.mubr.bf16.gmra.mrb[0].mxu0 %v1645
  %v1737 = vpop.f32.mrb[0].mxu0
  %v1738 = vadd.f32 0.0, %v1737
  %v1739 = vpop.f32.mrb[0].mxu0
  %v1740 = vpop.f32.mrb[0].mxu0
  %v1741 = vadd.f32 0.0, %v1740
  %v1742 = vpop.f32.mrb[0].mxu0
  %1743 = vdwg.mxu0
  %v1744 = vadd.f32 %v1141, %v1682
  %v1745 = vadd.f32 %v1142, %v1685
  %v1746 = vadd.f32 %v1143, %v1690
  %v1747 = vadd.f32 %v1144, %v1693
  %v1748 = vadd.f32 %v1145, %v1698
  %v1749 = vadd.f32 %v1146, %v1701
  %v1750 = vadd.f32 %v1147, %v1706
  %v1751 = vadd.f32 %v1148, %v1709
  %v1752 = vadd.f32 %v1149, %v1714
  %v1753 = vadd.f32 %v1150, %v1717
  %v1754 = vadd.f32 %v1151, %v1722
  %v1755 = vadd.f32 %v1152, %v1725
  %v1756 = vadd.f32 %v1153, %v1730
  %v1757 = vadd.f32 %v1154, %v1733
  %v1758 = vadd.f32 %v1155, %v1738
  %v1759 = vadd.f32 %v1156, %v1741
  %v1760 = vadd.f32 %v37, %v1744
  %v1761 = vadd.f32 %v38, %v1745
  %v1762 = vadd.f32 %v39, %v1746
  %v1763 = vadd.f32 %v40, %v1747
  %v1764 = vadd.f32 %v41, %v1748
  %v1765 = vadd.f32 %v42, %v1749
  %v1766 = vadd.f32 %v43, %v1750
  %v1767 = vadd.f32 %v44, %v1751
  %v1768 = vadd.f32 %v45, %v1752
  %v1769 = vadd.f32 %v46, %v1753
  %v1770 = vadd.f32 %v47, %v1754
  %v1771 = vadd.f32 %v48, %v1755
  %v1772 = vadd.f32 %v49, %v1756
  %v1773 = vadd.f32 %v50, %v1757
  %v1774 = vadd.f32 %v51, %v1758
  %v1775 = vadd.f32 %v52, %v1759
  %v1776 = vsel %vm115, %v1760, 0.0
  %1777 = vadd.xlane.f32.xlu0 %v1776
  %v1778 = vpop.xlane.xlu0 %1777
  %v1779 = vsel %vm115, %v1761, 0.0
  %1780 = vadd.xlane.f32.xlu0 %v1779
  %v1781 = vpop.xlane.xlu0 %1780
  %v1782 = vsel %vm115, %v1762, 0.0
  %1783 = vadd.xlane.f32.xlu0 %v1782
  %v1784 = vpop.xlane.xlu0 %1783
  %v1785 = vsel %vm115, %v1763, 0.0
  %1786 = vadd.xlane.f32.xlu0 %v1785
  %v1787 = vpop.xlane.xlu0 %1786
  %v1788 = vsel %vm115, %v1764, 0.0
  %1789 = vadd.xlane.f32.xlu0 %v1788
  %v1790 = vpop.xlane.xlu0 %1789
  %v1791 = vsel %vm115, %v1765, 0.0
  %1792 = vadd.xlane.f32.xlu0 %v1791
  %v1793 = vpop.xlane.xlu0 %1792
  %v1794 = vsel %vm115, %v1766, 0.0
  %1795 = vadd.xlane.f32.xlu0 %v1794
  %v1796 = vpop.xlane.xlu0 %1795
  %v1797 = vsel %vm115, %v1767, 0.0
  %1798 = vadd.xlane.f32.xlu0 %v1797
  %v1799 = vpop.xlane.xlu0 %1798
  %v1800 = vsel %vm115, %v1768, 0.0
  %1801 = vadd.xlane.f32.xlu0 %v1800
  %v1802 = vpop.xlane.xlu0 %1801
  %v1803 = vsel %vm115, %v1769, 0.0
  %1804 = vadd.xlane.f32.xlu0 %v1803
  %v1805 = vpop.xlane.xlu0 %1804
  %v1806 = vsel %vm115, %v1770, 0.0
  %1807 = vadd.xlane.f32.xlu0 %v1806
  %v1808 = vpop.xlane.xlu0 %1807
  %v1809 = vsel %vm115, %v1771, 0.0
  %1810 = vadd.xlane.f32.xlu0 %v1809
  %v1811 = vpop.xlane.xlu0 %1810
  %v1812 = vsel %vm115, %v1772, 0.0
  %1813 = vadd.xlane.f32.xlu0 %v1812
  %v1814 = vpop.xlane.xlu0 %1813
  %v1815 = vsel %vm115, %v1773, 0.0
  %1816 = vadd.xlane.f32.xlu0 %v1815
  %v1817 = vpop.xlane.xlu0 %1816
  %v1818 = vsel %vm115, %v1774, 0.0
  %1819 = vadd.xlane.f32.xlu0 %v1818
  %v1820 = vpop.xlane.xlu0 %1819
  %v1821 = vsel %vm115, %v1775, 0.0
  %1822 = vadd.xlane.f32.xlu0 %v1821
  %v1823 = vpop.xlane.xlu0 %1822
  %v1824 = vmul.f32 %v1778, %v164
  %v1825 = vmul.f32 %v1781, %v164
  %v1826 = vmul.f32 %v1784, %v164
  %v1827 = vmul.f32 %v1787, %v164
  %v1828 = vmul.f32 %v1790, %v164
  %v1829 = vmul.f32 %v1793, %v164
  %v1830 = vmul.f32 %v1796, %v164
  %v1831 = vmul.f32 %v1799, %v164
  %v1832 = vmul.f32 %v1802, %v164
  %v1833 = vmul.f32 %v1805, %v164
  %v1834 = vmul.f32 %v1808, %v164
  %v1835 = vmul.f32 %v1811, %v164
  %v1836 = vmul.f32 %v1814, %v164
  %v1837 = vmul.f32 %v1817, %v164
  %v1838 = vmul.f32 %v1820, %v164
  %v1839 = vmul.f32 %v1823, %v164
  %v1840 = vsub.f32 %v1760, %v1824
  %v1841 = vsub.f32 %v1761, %v1825
  %v1842 = vsub.f32 %v1762, %v1826
  %v1843 = vsub.f32 %v1763, %v1827
  %v1844 = vsub.f32 %v1764, %v1828
  %v1845 = vsub.f32 %v1765, %v1829
  %v1846 = vsub.f32 %v1766, %v1830
  %v1847 = vsub.f32 %v1767, %v1831
  %v1848 = vsub.f32 %v1768, %v1832
  %v1849 = vsub.f32 %v1769, %v1833
  %v1850 = vsub.f32 %v1770, %v1834
  %v1851 = vsub.f32 %v1771, %v1835
  %v1852 = vsub.f32 %v1772, %v1836
  %v1853 = vsub.f32 %v1773, %v1837
  %v1854 = vsub.f32 %v1774, %v1838
  %v1855 = vsub.f32 %v1775, %v1839
  %v1856 = vmul.f32 %v1840, %v1840
  %v1857 = vmul.f32 %v1841, %v1841
  %v1858 = vmul.f32 %v1842, %v1842
  %v1859 = vmul.f32 %v1843, %v1843
  %v1860 = vmul.f32 %v1844, %v1844
  %v1861 = vmul.f32 %v1845, %v1845
  %v1862 = vmul.f32 %v1846, %v1846
  %v1863 = vmul.f32 %v1847, %v1847
  %v1864 = vmul.f32 %v1848, %v1848
  %v1865 = vmul.f32 %v1849, %v1849
  %v1866 = vmul.f32 %v1850, %v1850
  %v1867 = vmul.f32 %v1851, %v1851
  %v1868 = vmul.f32 %v1852, %v1852
  %v1869 = vmul.f32 %v1853, %v1853
  %v1870 = vmul.f32 %v1854, %v1854
  %v1871 = vmul.f32 %v1855, %v1855
  %v1872 = vsel %vm115, %v1856, 0.0
  %1873 = vadd.xlane.f32.xlu0 %v1872
  %v1874 = vpop.xlane.xlu0 %1873
  %v1875 = vsel %vm115, %v1857, 0.0
  %1876 = vadd.xlane.f32.xlu0 %v1875
  %v1877 = vpop.xlane.xlu0 %1876
  %v1878 = vsel %vm115, %v1858, 0.0
  %1879 = vadd.xlane.f32.xlu0 %v1878
  %v1880 = vpop.xlane.xlu0 %1879
  %v1881 = vsel %vm115, %v1859, 0.0
  %1882 = vadd.xlane.f32.xlu0 %v1881
  %v1883 = vpop.xlane.xlu0 %1882
  %v1884 = vsel %vm115, %v1860, 0.0
  %1885 = vadd.xlane.f32.xlu0 %v1884
  %v1886 = vpop.xlane.xlu0 %1885
  %v1887 = vsel %vm115, %v1861, 0.0
  %1888 = vadd.xlane.f32.xlu0 %v1887
  %v1889 = vpop.xlane.xlu0 %1888
  %v1890 = vsel %vm115, %v1862, 0.0
  %1891 = vadd.xlane.f32.xlu0 %v1890
  %v1892 = vpop.xlane.xlu0 %1891
  %v1893 = vsel %vm115, %v1863, 0.0
  %1894 = vadd.xlane.f32.xlu0 %v1893
  %v1895 = vpop.xlane.xlu0 %1894
  %v1896 = vsel %vm115, %v1864, 0.0
  %1897 = vadd.xlane.f32.xlu0 %v1896
  %v1898 = vpop.xlane.xlu0 %1897
  %v1899 = vsel %vm115, %v1865, 0.0
  %1900 = vadd.xlane.f32.xlu0 %v1899
  %v1901 = vpop.xlane.xlu0 %1900
  %v1902 = vsel %vm115, %v1866, 0.0
  %1903 = vadd.xlane.f32.xlu0 %v1902
  %v1904 = vpop.xlane.xlu0 %1903
  %v1905 = vsel %vm115, %v1867, 0.0
  %1906 = vadd.xlane.f32.xlu0 %v1905
  %v1907 = vpop.xlane.xlu0 %1906
  %v1908 = vsel %vm115, %v1868, 0.0
  %1909 = vadd.xlane.f32.xlu0 %v1908
  %v1910 = vpop.xlane.xlu0 %1909
  %v1911 = vsel %vm115, %v1869, 0.0
  %1912 = vadd.xlane.f32.xlu0 %v1911
  %v1913 = vpop.xlane.xlu0 %1912
  %v1914 = vsel %vm115, %v1870, 0.0
  %1915 = vadd.xlane.f32.xlu0 %v1914
  %v1916 = vpop.xlane.xlu0 %1915
  %v1917 = vsel %vm115, %v1871, 0.0
  %1918 = vadd.xlane.f32.xlu0 %v1917
  %v1919 = vpop.xlane.xlu0 %1918
  %v1920 = vmul.f32 %v1874, %v164
  %v1921 = vmul.f32 %v1877, %v164
  %v1922 = vmul.f32 %v1880, %v164
  %v1923 = vmul.f32 %v1883, %v164
  %v1924 = vmul.f32 %v1886, %v164
  %v1925 = vmul.f32 %v1889, %v164
  %v1926 = vmul.f32 %v1892, %v164
  %v1927 = vmul.f32 %v1895, %v164
  %v1928 = vmul.f32 %v1898, %v164
  %v1929 = vmul.f32 %v1901, %v164
  %v1930 = vmul.f32 %v1904, %v164
  %v1931 = vmul.f32 %v1907, %v164
  %v1932 = vmul.f32 %v1910, %v164
  %v1933 = vmul.f32 %v1913, %v164
  %v1934 = vmul.f32 %v1916, %v164
  %v1935 = vmul.f32 %v1919, %v164
  %v1936 = vadd.f32 %v1920, 1e-05
  %v1937 = vadd.f32 %v1921, 1e-05
  %v1938 = vadd.f32 %v1922, 1e-05
  %v1939 = vadd.f32 %v1923, 1e-05
  %v1940 = vadd.f32 %v1924, 1e-05
  %v1941 = vadd.f32 %v1925, 1e-05
  %v1942 = vadd.f32 %v1926, 1e-05
  %v1943 = vadd.f32 %v1927, 1e-05
  %v1944 = vadd.f32 %v1928, 1e-05
  %v1945 = vadd.f32 %v1929, 1e-05
  %v1946 = vadd.f32 %v1930, 1e-05
  %v1947 = vadd.f32 %v1931, 1e-05
  %v1948 = vadd.f32 %v1932, 1e-05
  %v1949 = vadd.f32 %v1933, 1e-05
  %v1950 = vadd.f32 %v1934, 1e-05
  %v1951 = vadd.f32 %v1935, 1e-05
  %v1952 = vrsqrt.pop %v1936
  %v1953 = vrsqrt.pop %v1937
  %v1954 = vrsqrt.pop %v1938
  %v1955 = vrsqrt.pop %v1939
  %v1956 = vrsqrt.pop %v1940
  %v1957 = vrsqrt.pop %v1941
  %v1958 = vrsqrt.pop %v1942
  %v1959 = vrsqrt.pop %v1943
  %v1960 = vrsqrt.pop %v1944
  %v1961 = vrsqrt.pop %v1945
  %v1962 = vrsqrt.pop %v1946
  %v1963 = vrsqrt.pop %v1947
  %v1964 = vrsqrt.pop %v1948
  %v1965 = vrsqrt.pop %v1949
  %v1966 = vrsqrt.pop %v1950
  %v1967 = vrsqrt.pop %v1951
  %v1968 = vmul.f32 %v1840, %v1952
  %v1969 = vmul.f32 %v1841, %v1953
  %v1970 = vmul.f32 %v1842, %v1954
  %v1971 = vmul.f32 %v1843, %v1955
  %v1972 = vmul.f32 %v1844, %v1956
  %v1973 = vmul.f32 %v1845, %v1957
  %v1974 = vmul.f32 %v1846, %v1958
  %v1975 = vmul.f32 %v1847, %v1959
  %v1976 = vmul.f32 %v1848, %v1960
  %v1977 = vmul.f32 %v1849, %v1961
  %v1978 = vmul.f32 %v1850, %v1962
  %v1979 = vmul.f32 %v1851, %v1963
  %v1980 = vmul.f32 %v1852, %v1964
  %v1981 = vmul.f32 %v1853, %v1965
  %v1982 = vmul.f32 %v1854, %v1966
  %v1983 = vmul.f32 %v1855, %v1967
  %v1984 = vlaneseq
  %v1985 = vshrl.u32 %v1984, 7
  %v1986 = vsub.s32 0, %v1985
  %v1987 = vrot.slane %v55, %v1986
  %v1988 = vmul.f32 %v1968, %v1987
  %v1989 = vmul.f32 %v1969, %v1987
  %v1990 = vmul.f32 %v1970, %v1987
  %v1991 = vmul.f32 %v1971, %v1987
  %v1992 = vmul.f32 %v1972, %v1987
  %v1993 = vmul.f32 %v1973, %v1987
  %v1994 = vmul.f32 %v1974, %v1987
  %v1995 = vmul.f32 %v1975, %v1987
  %v1996 = vmul.f32 %v1976, %v1987
  %v1997 = vmul.f32 %v1977, %v1987
  %v1998 = vmul.f32 %v1978, %v1987
  %v1999 = vmul.f32 %v1979, %v1987
  %v2000 = vmul.f32 %v1980, %v1987
  %v2001 = vmul.f32 %v1981, %v1987
  %v2002 = vmul.f32 %v1982, %v1987
  %v2003 = vmul.f32 %v1983, %v1987
  %v2004 = vlaneseq
  %v2005 = vshrl.u32 %v2004, 7
  %v2006 = vsub.s32 0, %v2005
  %v2007 = vrot.slane %v56, %v2006
  %v2008 = vadd.f32 %v1988, %v2007
  %v2009 = vadd.f32 %v1989, %v2007
  %v2010 = vadd.f32 %v1990, %v2007
  %v2011 = vadd.f32 %v1991, %v2007
  %v2012 = vadd.f32 %v1992, %v2007
  %v2013 = vadd.f32 %v1993, %v2007
  %v2014 = vadd.f32 %v1994, %v2007
  %v2015 = vadd.f32 %v1995, %v2007
  %v2016 = vadd.f32 %v1996, %v2007
  %v2017 = vadd.f32 %v1997, %v2007
  %v2018 = vadd.f32 %v1998, %v2007
  %v2019 = vadd.f32 %v1999, %v2007
  %v2020 = vadd.f32 %v2000, %v2007
  %v2021 = vadd.f32 %v2001, %v2007
  %v2022 = vadd.f32 %v2002, %v2007
  %v2023 = vadd.f32 %v2003, %v2007
  %v2024 = vpack.c.bf16 %v2009, %v2008
  %v2025 = vpack.c.bf16 %v2011, %v2010
  %v2026 = vpack.c.bf16 %v2013, %v2012
  %v2027 = vpack.c.bf16 %v2015, %v2014
  %v2028 = vpack.c.bf16 %v2017, %v2016
  %v2029 = vpack.c.bf16 %v2019, %v2018
  %v2030 = vpack.c.bf16 %v2021, %v2020
  %v2031 = vpack.c.bf16 %v2023, %v2022
  %v2032 = vlaneseq
  %v2033 = vshrl.u32 %v2032, 7
  %v2034 = vsub.s32 0, %v2033
  %v2035 = vrot.slane %v59, %v2034
  %v2040 = vunpack.c.l.b16 %v67
  %v2041 = vunpack.c.l.b16 %v68
  %v2042 = vunpack.c.l.b16 %v69
  %v2043 = vunpack.c.l.b16 %v70
  %v2044 = vpack.c.b16 %v2041, %v2040
  %v2045 = vpack.c.b16 %v2043, %v2042
  %v2049 = vsel %vm115, %v2024, 0
  %v2052 = vsel %vm115, %v2025, 0
  %v2055 = vsel %vm115, %v2026, 0
  %v2058 = vsel %vm115, %v2027, 0
  %v2061 = vsel %vm115, %v2028, 0
  %v2064 = vsel %vm115, %v2029, 0
  %v2067 = vsel %vm115, %v2030, 0
  %v2070 = vsel %vm115, %v2031, 0
  %2072 = vmatprep.subr.bf16.mxu0 0
  %2073 = vmatpush1.bf16.msra.mxu0 %v2044
  %2074 = vmatprep.subr.bf16.mxu0 0
  %2075 = vmatpush1.bf16.msra.mxu0 %v2045
  %2076 = vmatprep.subr.bf16.mxu0 0
  %2077 = vmatpush1.bf16.msra.mxu0 0
  %2078 = vmatprep.subr.bf16.mxu0 0
  %2079 = vmatpush1.bf16.msra.mxu0 0
  %2080 = vmatprep.subr.bf16.mxu0 0
  %2081 = vmatpush1.bf16.msra.mxu0 0
  %2082 = vmatprep.subr.bf16.mxu0 0
  %2083 = vmatpush1.bf16.msra.mxu0 0
  %2084 = vmatprep.subr.bf16.mxu0 0
  %2085 = vmatpush1.bf16.msra.mxu0 0
  %2086 = vmatprep.subr.bf16.mxu0 0
  %2087 = vmatpush1.bf16.msra.mxu0 0
  %2088 = vmatprep.subr.bf16.mxu0 0
  %2089 = vmatpush1.bf16.msra.mxu0 0
  %2090 = vmatprep.subr.bf16.mxu0 0
  %2091 = vmatpush1.bf16.msra.mxu0 0
  %2092 = vmatprep.subr.bf16.mxu0 0
  %2093 = vmatpush1.bf16.msra.mxu0 0
  %2094 = vmatprep.subr.bf16.mxu0 0
  %2095 = vmatpush1.bf16.msra.mxu0 0
  %2096 = vmatprep.subr.bf16.mxu0 0
  %2097 = vmatpush1.bf16.msra.mxu0 0
  %2098 = vmatprep.subr.bf16.mxu0 0
  %2099 = vmatpush1.bf16.msra.mxu0 0
  %2100 = vmatprep.subr.bf16.mxu0 0
  %2101 = vmatpush1.bf16.msra.mxu0 0
  %2102 = vmatprep.subr.bf16.mxu0 0
  %2103 = vmatpush1.bf16.msra.mxu0 0
  %2104 = vmatprep.mubr.bf16.mxu0 0
  %2105 = vmatmul.mubr.bf16.gmra.mrb[0].mxu0 %v2049
  %v2106 = vpop.f32.mrb[0].mxu0
  %v2107 = vadd.f32 %v2035, %v2106
  %v2108 = vpop.f32.mrb[0].mxu0
  %v2109 = vpop.f32.mrb[0].mxu0
  %v2110 = vadd.f32 %v2035, %v2109
  %v2111 = vpop.f32.mrb[0].mxu0
  %2112 = vmatprep.mubr.bf16.mxu0 0
  %2113 = vmatmul.mubr.bf16.gmra.mrb[0].mxu0 %v2052
  %v2114 = vpop.f32.mrb[0].mxu0
  %v2115 = vadd.f32 %v2035, %v2114
  %v2116 = vpop.f32.mrb[0].mxu0
  %v2117 = vpop.f32.mrb[0].mxu0
  %v2118 = vadd.f32 %v2035, %v2117
  %v2119 = vpop.f32.mrb[0].mxu0
  %2120 = vmatprep.mubr.bf16.mxu0 0
  %2121 = vmatmul.mubr.bf16.gmra.mrb[0].mxu0 %v2055
  %v2122 = vpop.f32.mrb[0].mxu0
  %v2123 = vadd.f32 %v2035, %v2122
  %v2124 = vpop.f32.mrb[0].mxu0
  %v2125 = vpop.f32.mrb[0].mxu0
  %v2126 = vadd.f32 %v2035, %v2125
  %v2127 = vpop.f32.mrb[0].mxu0
  %2128 = vmatprep.mubr.bf16.mxu0 0
  %2129 = vmatmul.mubr.bf16.gmra.mrb[0].mxu0 %v2058
  %v2130 = vpop.f32.mrb[0].mxu0
  %v2131 = vadd.f32 %v2035, %v2130
  %v2132 = vpop.f32.mrb[0].mxu0
  %v2133 = vpop.f32.mrb[0].mxu0
  %v2134 = vadd.f32 %v2035, %v2133
  %v2135 = vpop.f32.mrb[0].mxu0
  %2136 = vmatprep.mubr.bf16.mxu0 0
  %2137 = vmatmul.mubr.bf16.gmra.mrb[0].mxu0 %v2061
  %v2138 = vpop.f32.mrb[0].mxu0
  %v2139 = vadd.f32 %v2035, %v2138
  %v2140 = vpop.f32.mrb[0].mxu0
  %v2141 = vpop.f32.mrb[0].mxu0
  %v2142 = vadd.f32 %v2035, %v2141
  %v2143 = vpop.f32.mrb[0].mxu0
  %2144 = vmatprep.mubr.bf16.mxu0 0
  %2145 = vmatmul.mubr.bf16.gmra.mrb[0].mxu0 %v2064
  %v2146 = vpop.f32.mrb[0].mxu0
  %v2147 = vadd.f32 %v2035, %v2146
  %v2148 = vpop.f32.mrb[0].mxu0
  %v2149 = vpop.f32.mrb[0].mxu0
  %v2150 = vadd.f32 %v2035, %v2149
  %v2151 = vpop.f32.mrb[0].mxu0
  %2152 = vmatprep.mubr.bf16.mxu0 0
  %2153 = vmatmul.mubr.bf16.gmra.mrb[0].mxu0 %v2067
  %v2154 = vpop.f32.mrb[0].mxu0
  %v2155 = vadd.f32 %v2035, %v2154
  %v2156 = vpop.f32.mrb[0].mxu0
  %v2157 = vpop.f32.mrb[0].mxu0
  %v2158 = vadd.f32 %v2035, %v2157
  %v2159 = vpop.f32.mrb[0].mxu0
  %2160 = vmatprep.mubr.bf16.mxu0 0
  %2161 = vmatmul.mubr.bf16.gmra.mrb[0].mxu0 %v2070
  %v2162 = vpop.f32.mrb[0].mxu0
  %v2163 = vadd.f32 %v2035, %v2162
  %v2164 = vpop.f32.mrb[0].mxu0
  %v2165 = vpop.f32.mrb[0].mxu0
  %v2166 = vadd.f32 %v2035, %v2165
  %v2167 = vpop.f32.mrb[0].mxu0
  %2168 = vdwg.mxu0
  %v2169 = vmax.f32 %v2107, 0.0
  %v2170 = vmax.f32 %v2110, 0.0
  %v2171 = vmax.f32 %v2115, 0.0
  %v2172 = vmax.f32 %v2118, 0.0
  %v2173 = vmax.f32 %v2123, 0.0
  %v2174 = vmax.f32 %v2126, 0.0
  %v2175 = vmax.f32 %v2131, 0.0
  %v2176 = vmax.f32 %v2134, 0.0
  %v2177 = vmax.f32 %v2139, 0.0
  %v2178 = vmax.f32 %v2142, 0.0
  %v2179 = vmax.f32 %v2147, 0.0
  %v2180 = vmax.f32 %v2150, 0.0
  %v2181 = vmax.f32 %v2155, 0.0
  %v2182 = vmax.f32 %v2158, 0.0
  %v2183 = vmax.f32 %v2163, 0.0
  %v2184 = vmax.f32 %v2166, 0.0
  %v2185 = vpack.c.bf16 %v2170, %v2169
  %v2186 = vpack.c.bf16 %v2172, %v2171
  %v2187 = vpack.c.bf16 %v2174, %v2173
  %v2188 = vpack.c.bf16 %v2176, %v2175
  %v2189 = vpack.c.bf16 %v2178, %v2177
  %v2190 = vpack.c.bf16 %v2180, %v2179
  %v2191 = vpack.c.bf16 %v2182, %v2181
  %v2192 = vpack.c.bf16 %v2184, %v2183
  %v2193 = vlaneseq
  %v2194 = vshrl.u32 %v2193, 7
  %v2195 = vsub.s32 0, %v2194
  %v2196 = vrot.slane %v60, %v2195
  %v2213 = vunpack.c.l.b16 %v71
  %v2214 = vunpack.c.l.b16 %v72
  %v2215 = vunpack.c.l.b16 %v73
  %v2216 = vunpack.c.l.b16 %v74
  %v2217 = vunpack.c.l.b16 %v75
  %v2218 = vunpack.c.l.b16 %v76
  %v2219 = vunpack.c.l.b16 %v77
  %v2220 = vunpack.c.l.b16 %v78
  %v2221 = vunpack.c.l.b16 %v79
  %v2222 = vunpack.c.l.b16 %v80
  %v2223 = vunpack.c.l.b16 %v81
  %v2224 = vunpack.c.l.b16 %v82
  %v2225 = vunpack.c.l.b16 %v83
  %v2226 = vunpack.c.l.b16 %v84
  %v2227 = vunpack.c.l.b16 %v85
  %v2228 = vunpack.c.l.b16 %v86
  %v2229 = vpack.c.b16 %v2214, %v2213
  %v2230 = vpack.c.b16 %v2216, %v2215
  %v2231 = vpack.c.b16 %v2218, %v2217
  %v2232 = vpack.c.b16 %v2220, %v2219
  %v2233 = vpack.c.b16 %v2222, %v2221
  %v2234 = vpack.c.b16 %v2224, %v2223
  %v2235 = vpack.c.b16 %v2226, %v2225
  %v2236 = vpack.c.b16 %v2228, %v2227
  %2245 = vmatprep.subr.bf16.mxu0 0
  %2246 = vmatpush1.bf16.msra.mxu0 %v2229
  %2247 = vmatprep.subr.bf16.mxu0 0
  %2248 = vmatpush1.bf16.msra.mxu0 %v2230
  %2249 = vmatprep.subr.bf16.mxu0 0
  %2250 = vmatpush1.bf16.msra.mxu0 %v2231
  %2251 = vmatprep.subr.bf16.mxu0 0
  %2252 = vmatpush1.bf16.msra.mxu0 %v2232
  %2253 = vmatprep.subr.bf16.mxu0 0
  %2254 = vmatpush1.bf16.msra.mxu0 %v2233
  %2255 = vmatprep.subr.bf16.mxu0 0
  %2256 = vmatpush1.bf16.msra.mxu0 %v2234
  %2257 = vmatprep.subr.bf16.mxu0 0
  %2258 = vmatpush1.bf16.msra.mxu0 %v2235
  %2259 = vmatprep.subr.bf16.mxu0 0
  %2260 = vmatpush1.bf16.msra.mxu0 %v2236
  %2261 = vmatprep.subr.bf16.mxu0 0
  %2262 = vmatpush1.bf16.msra.mxu0 0
  %2263 = vmatprep.subr.bf16.mxu0 0
  %2264 = vmatpush1.bf16.msra.mxu0 0
  %2265 = vmatprep.subr.bf16.mxu0 0
  %2266 = vmatpush1.bf16.msra.mxu0 0
  %2267 = vmatprep.subr.bf16.mxu0 0
  %2268 = vmatpush1.bf16.msra.mxu0 0
  %2269 = vmatprep.subr.bf16.mxu0 0
  %2270 = vmatpush1.bf16.msra.mxu0 0
  %2271 = vmatprep.subr.bf16.mxu0 0
  %2272 = vmatpush1.bf16.msra.mxu0 0
  %2273 = vmatprep.subr.bf16.mxu0 0
  %2274 = vmatpush1.bf16.msra.mxu0 0
  %2275 = vmatprep.subr.bf16.mxu0 0
  %2276 = vmatpush1.bf16.msra.mxu0 0
  %2277 = vmatprep.mubr.bf16.mxu0 0
  %2278 = vmatmul.mubr.bf16.gmra.mrb[0].mxu0 %v2185
  %v2279 = vpop.f32.mrb[0].mxu0
  %v2280 = vadd.f32 %v2196, %v2279
  %v2281 = vpop.f32.mrb[0].mxu0
  %v2282 = vpop.f32.mrb[0].mxu0
  %v2283 = vadd.f32 %v2196, %v2282
  %v2284 = vpop.f32.mrb[0].mxu0
  %2285 = vmatprep.mubr.bf16.mxu0 0
  %2286 = vmatmul.mubr.bf16.gmra.mrb[0].mxu0 %v2186
  %v2287 = vpop.f32.mrb[0].mxu0
  %v2288 = vadd.f32 %v2196, %v2287
  %v2289 = vpop.f32.mrb[0].mxu0
  %v2290 = vpop.f32.mrb[0].mxu0
  %v2291 = vadd.f32 %v2196, %v2290
  %v2292 = vpop.f32.mrb[0].mxu0
  %2293 = vmatprep.mubr.bf16.mxu0 0
  %2294 = vmatmul.mubr.bf16.gmra.mrb[0].mxu0 %v2187
  %v2295 = vpop.f32.mrb[0].mxu0
  %v2296 = vadd.f32 %v2196, %v2295
  %v2297 = vpop.f32.mrb[0].mxu0
  %v2298 = vpop.f32.mrb[0].mxu0
  %v2299 = vadd.f32 %v2196, %v2298
  %v2300 = vpop.f32.mrb[0].mxu0
  %2301 = vmatprep.mubr.bf16.mxu0 0
  %2302 = vmatmul.mubr.bf16.gmra.mrb[0].mxu0 %v2188
  %v2303 = vpop.f32.mrb[0].mxu0
  %v2304 = vadd.f32 %v2196, %v2303
  %v2305 = vpop.f32.mrb[0].mxu0
  %v2306 = vpop.f32.mrb[0].mxu0
  %v2307 = vadd.f32 %v2196, %v2306
  %v2308 = vpop.f32.mrb[0].mxu0
  %2309 = vmatprep.mubr.bf16.mxu0 0
  %2310 = vmatmul.mubr.bf16.gmra.mrb[0].mxu0 %v2189
  %v2311 = vpop.f32.mrb[0].mxu0
  %v2312 = vadd.f32 %v2196, %v2311
  %v2313 = vpop.f32.mrb[0].mxu0
  %v2314 = vpop.f32.mrb[0].mxu0
  %v2315 = vadd.f32 %v2196, %v2314
  %v2316 = vpop.f32.mrb[0].mxu0
  %2317 = vmatprep.mubr.bf16.mxu0 0
  %2318 = vmatmul.mubr.bf16.gmra.mrb[0].mxu0 %v2190
  %v2319 = vpop.f32.mrb[0].mxu0
  %v2320 = vadd.f32 %v2196, %v2319
  %v2321 = vpop.f32.mrb[0].mxu0
  %v2322 = vpop.f32.mrb[0].mxu0
  %v2323 = vadd.f32 %v2196, %v2322
  %v2324 = vpop.f32.mrb[0].mxu0
  %2325 = vmatprep.mubr.bf16.mxu0 0
  %2326 = vmatmul.mubr.bf16.gmra.mrb[0].mxu0 %v2191
  %v2327 = vpop.f32.mrb[0].mxu0
  %v2328 = vadd.f32 %v2196, %v2327
  %v2329 = vpop.f32.mrb[0].mxu0
  %v2330 = vpop.f32.mrb[0].mxu0
  %v2331 = vadd.f32 %v2196, %v2330
  %v2332 = vpop.f32.mrb[0].mxu0
  %2333 = vmatprep.mubr.bf16.mxu0 0
  %2334 = vmatmul.mubr.bf16.gmra.mrb[0].mxu0 %v2192
  %v2335 = vpop.f32.mrb[0].mxu0
  %v2336 = vadd.f32 %v2196, %v2335
  %v2337 = vpop.f32.mrb[0].mxu0
  %v2338 = vpop.f32.mrb[0].mxu0
  %v2339 = vadd.f32 %v2196, %v2338
  %v2340 = vpop.f32.mrb[0].mxu0
  %2341 = vdwg.mxu0
  %v2342 = vadd.f32 %v1760, %v2280
  %v2343 = vadd.f32 %v1761, %v2283
  %v2344 = vadd.f32 %v1762, %v2288
  %v2345 = vadd.f32 %v1763, %v2291
  %v2346 = vadd.f32 %v1764, %v2296
  %v2347 = vadd.f32 %v1765, %v2299
  %v2348 = vadd.f32 %v1766, %v2304
  %v2349 = vadd.f32 %v1767, %v2307
  %v2350 = vadd.f32 %v1768, %v2312
  %v2351 = vadd.f32 %v1769, %v2315
  %v2352 = vadd.f32 %v1770, %v2320
  %v2353 = vadd.f32 %v1771, %v2323
  %v2354 = vadd.f32 %v1772, %v2328
  %v2355 = vadd.f32 %v1773, %v2331
  %v2356 = vadd.f32 %v1774, %v2336
  %v2357 = vadd.f32 %v1775, %v2339
  %v2358 = vsel %vm115, %v2342, 0.0
  %v2359 = vrot.slane %v2358, 4
  %v2360 = vadd.f32 %v2358, %v2359
  %v2361 = vrot.slane %v2360, 2
  %v2362 = vadd.f32 %v2360, %v2361
  %v2363 = vrot.slane %v2362, 1
  %v2364 = vadd.f32 %v2362, %v2363
  %v2365 = vsel %vm115, %v2343, 0.0
  %v2366 = vrot.slane %v2365, 4
  %v2367 = vadd.f32 %v2365, %v2366
  %v2368 = vrot.slane %v2367, 2
  %v2369 = vadd.f32 %v2367, %v2368
  %v2370 = vrot.slane %v2369, 1
  %v2371 = vadd.f32 %v2369, %v2370
  %v2372 = vsel %vm115, %v2344, 0.0
  %v2373 = vrot.slane %v2372, 4
  %v2374 = vadd.f32 %v2372, %v2373
  %v2375 = vrot.slane %v2374, 2
  %v2376 = vadd.f32 %v2374, %v2375
  %v2377 = vrot.slane %v2376, 1
  %v2378 = vadd.f32 %v2376, %v2377
  %v2379 = vsel %vm115, %v2345, 0.0
  %v2380 = vrot.slane %v2379, 4
  %v2381 = vadd.f32 %v2379, %v2380
  %v2382 = vrot.slane %v2381, 2
  %v2383 = vadd.f32 %v2381, %v2382
  %v2384 = vrot.slane %v2383, 1
  %v2385 = vadd.f32 %v2383, %v2384
  %v2386 = vsel %vm115, %v2346, 0.0
  %v2387 = vrot.slane %v2386, 4
  %v2388 = vadd.f32 %v2386, %v2387
  %v2389 = vrot.slane %v2388, 2
  %v2390 = vadd.f32 %v2388, %v2389
  %v2391 = vrot.slane %v2390, 1
  %v2392 = vadd.f32 %v2390, %v2391
  %v2393 = vsel %vm115, %v2347, 0.0
  %v2394 = vrot.slane %v2393, 4
  %v2395 = vadd.f32 %v2393, %v2394
  %v2396 = vrot.slane %v2395, 2
  %v2397 = vadd.f32 %v2395, %v2396
  %v2398 = vrot.slane %v2397, 1
  %v2399 = vadd.f32 %v2397, %v2398
  %v2400 = vsel %vm115, %v2348, 0.0
  %v2401 = vrot.slane %v2400, 4
  %v2402 = vadd.f32 %v2400, %v2401
  %v2403 = vrot.slane %v2402, 2
  %v2404 = vadd.f32 %v2402, %v2403
  %v2405 = vrot.slane %v2404, 1
  %v2406 = vadd.f32 %v2404, %v2405
  %v2407 = vsel %vm115, %v2349, 0.0
  %v2408 = vrot.slane %v2407, 4
  %v2409 = vadd.f32 %v2407, %v2408
  %v2410 = vrot.slane %v2409, 2
  %v2411 = vadd.f32 %v2409, %v2410
  %v2412 = vrot.slane %v2411, 1
  %v2413 = vadd.f32 %v2411, %v2412
  %v2414 = vsel %vm115, %v2350, 0.0
  %v2415 = vrot.slane %v2414, 4
  %v2416 = vadd.f32 %v2414, %v2415
  %v2417 = vrot.slane %v2416, 2
  %v2418 = vadd.f32 %v2416, %v2417
  %v2419 = vrot.slane %v2418, 1
  %v2420 = vadd.f32 %v2418, %v2419
  %v2421 = vsel %vm115, %v2351, 0.0
  %v2422 = vrot.slane %v2421, 4
  %v2423 = vadd.f32 %v2421, %v2422
  %v2424 = vrot.slane %v2423, 2
  %v2425 = vadd.f32 %v2423, %v2424
  %v2426 = vrot.slane %v2425, 1
  %v2427 = vadd.f32 %v2425, %v2426
  %v2428 = vsel %vm115, %v2352, 0.0
  %v2429 = vrot.slane %v2428, 4
  %v2430 = vadd.f32 %v2428, %v2429
  %v2431 = vrot.slane %v2430, 2
  %v2432 = vadd.f32 %v2430, %v2431
  %v2433 = vrot.slane %v2432, 1
  %v2434 = vadd.f32 %v2432, %v2433
  %v2435 = vsel %vm115, %v2353, 0.0
  %v2436 = vrot.slane %v2435, 4
  %v2437 = vadd.f32 %v2435, %v2436
  %v2438 = vrot.slane %v2437, 2
  %v2439 = vadd.f32 %v2437, %v2438
  %v2440 = vrot.slane %v2439, 1
  %v2441 = vadd.f32 %v2439, %v2440
  %v2442 = vsel %vm115, %v2354, 0.0
  %v2443 = vrot.slane %v2442, 4
  %v2444 = vadd.f32 %v2442, %v2443
  %v2445 = vrot.slane %v2444, 2
  %v2446 = vadd.f32 %v2444, %v2445
  %v2447 = vrot.slane %v2446, 1
  %v2448 = vadd.f32 %v2446, %v2447
  %v2449 = vsel %vm115, %v2355, 0.0
  %v2450 = vrot.slane %v2449, 4
  %v2451 = vadd.f32 %v2449, %v2450
  %v2452 = vrot.slane %v2451, 2
  %v2453 = vadd.f32 %v2451, %v2452
  %v2454 = vrot.slane %v2453, 1
  %v2455 = vadd.f32 %v2453, %v2454
  %v2456 = vsel %vm115, %v2356, 0.0
  %v2457 = vrot.slane %v2456, 4
  %v2458 = vadd.f32 %v2456, %v2457
  %v2459 = vrot.slane %v2458, 2
  %v2460 = vadd.f32 %v2458, %v2459
  %v2461 = vrot.slane %v2460, 1
  %v2462 = vadd.f32 %v2460, %v2461
  %v2463 = vsel %vm115, %v2357, 0.0
  %v2464 = vrot.slane %v2463, 4
  %v2465 = vadd.f32 %v2463, %v2464
  %v2466 = vrot.slane %v2465, 2
  %v2467 = vadd.f32 %v2465, %v2466
  %v2468 = vrot.slane %v2467, 1
  %v2469 = vadd.f32 %v2467, %v2468
  %v2470 = vmul.f32 %v2364, 0.125
  %v2471 = vmul.f32 %v2371, 0.125
  %v2472 = vmul.f32 %v2378, 0.125
  %v2473 = vmul.f32 %v2385, 0.125
  %v2474 = vmul.f32 %v2392, 0.125
  %v2475 = vmul.f32 %v2399, 0.125
  %v2476 = vmul.f32 %v2406, 0.125
  %v2477 = vmul.f32 %v2413, 0.125
  %v2478 = vmul.f32 %v2420, 0.125
  %v2479 = vmul.f32 %v2427, 0.125
  %v2480 = vmul.f32 %v2434, 0.125
  %v2481 = vmul.f32 %v2441, 0.125
  %v2482 = vmul.f32 %v2448, 0.125
  %v2483 = vmul.f32 %v2455, 0.125
  %v2484 = vmul.f32 %v2462, 0.125
  %v2485 = vmul.f32 %v2469, 0.125
  %v2486 = vsub.f32 %v2470, %v2478
  %v2487 = vsub.f32 %v2471, %v2479
  %v2488 = vsub.f32 %v2472, %v2480
  %v2489 = vsub.f32 %v2473, %v2481
  %v2490 = vsub.f32 %v2474, %v2482
  %v2491 = vsub.f32 %v2475, %v2483
  %v2492 = vsub.f32 %v2476, %v2484
  %v2493 = vsub.f32 %v2477, %v2485
  %vm2502 = vcmask 1041409
  %v2503 = vsel %vm2502, %v2471, %v2470
  %vm2504 = vcmask 1042434
  %v2505 = vsel %vm2504, %v2472, %v2503
  %vm2506 = vcmask 1043459
  %v2507 = vsel %vm2506, %v2473, %v2505
  %vm2508 = vcmask 1044484
  %v2509 = vsel %vm2508, %v2474, %v2507
  %vm2510 = vcmask 1045509
  %v2511 = vsel %vm2510, %v2475, %v2509
  %vm2512 = vcmask 1046534
  %v2513 = vsel %vm2512, %v2476, %v2511
  %vm2514 = vcmask 1047559
  %v2515 = vsel %vm2514, %v2477, %v2513
  %v2525 = vsel %vm2502, %v2479, %v2478
  %v2526 = vsel %vm2504, %v2480, %v2525
  %v2527 = vsel %vm2506, %v2481, %v2526
  %v2528 = vsel %vm2508, %v2482, %v2527
  %v2529 = vsel %vm2510, %v2483, %v2528
  %v2530 = vsel %vm2512, %v2484, %v2529
  %v2531 = vsel %vm2514, %v2485, %v2530
  %2532 = vrot.lane.b32.xlu0 %v2531, 32
  %v2533 = vpop.permute.xlu0 %2532
  %v2543 = vsel %vm2502, %v2487, %v2486
  %v2544 = vsel %vm2504, %v2488, %v2543
  %v2545 = vsel %vm2506, %v2489, %v2544
  %v2546 = vsel %vm2508, %v2490, %v2545
  %v2547 = vsel %vm2510, %v2491, %v2546
  %v2548 = vsel %vm2512, %v2492, %v2547
  %v2549 = vsel %vm2514, %v2493, %v2548
  %2550 = vrot.lane.b32.xlu0 %v2549, 64
  %v2551 = vpop.permute.xlu0 %2550
  %v2553 = vsel %vm115, %v2515, %v2533
  %vm2554 = vcmask 523264
  %v2555 = vsel %vm2554, %v2553, %v2551
  %v2556 = vpack.c.bf16 %v2555, %v2555
  %v2557 = vlaneseq
  %v2558 = vshrl.u32 %v2557, 7
  %v2559 = vsub.s32 0, %v2558
  %v2560 = vrot.slane %v61, %v2559
  %v2573 = vunpack.c.l.b16 %v87
  %v2574 = vunpack.c.l.b16 %v88
  %v2575 = vunpack.c.l.b16 %v89
  %v2576 = vunpack.c.l.b16 %v90
  %v2577 = vunpack.c.l.b16 %v91
  %v2578 = vunpack.c.l.b16 %v92
  %v2579 = vunpack.c.l.b16 %v93
  %v2580 = vunpack.c.l.b16 %v94
  %v2581 = vunpack.c.l.b16 %v95
  %v2582 = vunpack.c.l.b16 %v96
  %v2583 = vunpack.c.l.b16 %v97
  %v2584 = vunpack.c.l.b16 %v98
  %v2585 = vpack.c.b16 %v2574, %v2573
  %v2586 = vpack.c.b16 %v2576, %v2575
  %v2587 = vpack.c.b16 %v2578, %v2577
  %v2588 = vpack.c.b16 %v2580, %v2579
  %v2589 = vpack.c.b16 %v2582, %v2581
  %v2590 = vpack.c.b16 %v2584, %v2583
  %vm2597 = vcmask 785408
  %v2599 = vsel %vm2597, %v2556, 0
  %2601 = vmatprep.subr.bf16.mxu0 0
  %2602 = vmatpush1.bf16.msra.mxu0 %v2585
  %2603 = vmatprep.subr.bf16.mxu0 0
  %2604 = vmatpush1.bf16.msra.mxu0 %v2586
  %2605 = vmatprep.subr.bf16.mxu0 0
  %2606 = vmatpush1.bf16.msra.mxu0 %v2587
  %2607 = vmatprep.subr.bf16.mxu0 0
  %2608 = vmatpush1.bf16.msra.mxu0 %v2588
  %2609 = vmatprep.subr.bf16.mxu0 0
  %2610 = vmatpush1.bf16.msra.mxu0 %v2589
  %2611 = vmatprep.subr.bf16.mxu0 0
  %2612 = vmatpush1.bf16.msra.mxu0 %v2590
  %2613 = vmatprep.subr.bf16.mxu0 0
  %2614 = vmatpush1.bf16.msra.mxu0 0
  %2615 = vmatprep.subr.bf16.mxu0 0
  %2616 = vmatpush1.bf16.msra.mxu0 0
  %2617 = vmatprep.subr.bf16.mxu0 0
  %2618 = vmatpush1.bf16.msra.mxu0 0
  %2619 = vmatprep.subr.bf16.mxu0 0
  %2620 = vmatpush1.bf16.msra.mxu0 0
  %2621 = vmatprep.subr.bf16.mxu0 0
  %2622 = vmatpush1.bf16.msra.mxu0 0
  %2623 = vmatprep.subr.bf16.mxu0 0
  %2624 = vmatpush1.bf16.msra.mxu0 0
  %2625 = vmatprep.subr.bf16.mxu0 0
  %2626 = vmatpush1.bf16.msra.mxu0 0
  %2627 = vmatprep.subr.bf16.mxu0 0
  %2628 = vmatpush1.bf16.msra.mxu0 0
  %2629 = vmatprep.subr.bf16.mxu0 0
  %2630 = vmatpush1.bf16.msra.mxu0 0
  %2631 = vmatprep.subr.bf16.mxu0 0
  %2632 = vmatpush1.bf16.msra.mxu0 0
  %2633 = vmatprep.mubr.bf16.mxu0 0
  %2634 = vmatmul.mubr.bf16.gmra.mrb[0].mxu0 %v2599
  %v2635 = vpop.f32.mrb[0].mxu0
  %v2636 = vadd.f32 %v2560, %v2635
  %v2637 = vpop.f32.mrb[0].mxu0
  %v2638 = vpop.f32.mrb[0].mxu0
  %v2639 = vpop.f32.mrb[0].mxu0
  %2640 = vdwg.mxu0
  %v2641 = vmax.f32 %v2636, 0.0
  %v2642 = vpack.c.bf16 %v2641, %v2641
  %v2643 = vlaneseq
  %v2644 = vshrl.u32 %v2643, 7
  %v2645 = vsub.s32 0, %v2644
  %v2646 = vrot.slane %v62, %v2645
  %v2663 = vunpack.c.l.b16 %v99
  %v2664 = vunpack.c.l.b16 %v100
  %v2665 = vunpack.c.l.b16 %v101
  %v2666 = vunpack.c.l.b16 %v102
  %v2667 = vunpack.c.l.b16 %v103
  %v2668 = vunpack.c.l.b16 %v104
  %v2669 = vunpack.c.l.b16 %v105
  %v2670 = vunpack.c.l.b16 %v106
  %v2671 = vunpack.c.l.b16 %v107
  %v2672 = vunpack.c.l.b16 %v108
  %v2673 = vunpack.c.l.b16 %v109
  %v2674 = vunpack.c.l.b16 %v110
  %v2675 = vunpack.c.l.b16 %v111
  %v2676 = vunpack.c.l.b16 %v112
  %v2677 = vunpack.c.l.b16 %v113
  %v2678 = vunpack.c.l.b16 %v114
  %v2679 = vpack.c.b16 %v2664, %v2663
  %v2680 = vpack.c.b16 %v2666, %v2665
  %v2681 = vpack.c.b16 %v2668, %v2667
  %v2682 = vpack.c.b16 %v2670, %v2669
  %v2683 = vpack.c.b16 %v2672, %v2671
  %v2684 = vpack.c.b16 %v2674, %v2673
  %v2685 = vpack.c.b16 %v2676, %v2675
  %v2686 = vpack.c.b16 %v2678, %v2677
  %2695 = vmatprep.subr.bf16.mxu0 0
  %2696 = vmatpush1.bf16.msra.mxu0 %v2679
  %2697 = vmatprep.subr.bf16.mxu0 0
  %2698 = vmatpush1.bf16.msra.mxu0 %v2680
  %2699 = vmatprep.subr.bf16.mxu0 0
  %2700 = vmatpush1.bf16.msra.mxu0 %v2681
  %2701 = vmatprep.subr.bf16.mxu0 0
  %2702 = vmatpush1.bf16.msra.mxu0 %v2682
  %2703 = vmatprep.subr.bf16.mxu0 0
  %2704 = vmatpush1.bf16.msra.mxu0 %v2683
  %2705 = vmatprep.subr.bf16.mxu0 0
  %2706 = vmatpush1.bf16.msra.mxu0 %v2684
  %2707 = vmatprep.subr.bf16.mxu0 0
  %2708 = vmatpush1.bf16.msra.mxu0 %v2685
  %2709 = vmatprep.subr.bf16.mxu0 0
  %2710 = vmatpush1.bf16.msra.mxu0 %v2686
  %2711 = vmatprep.subr.bf16.mxu0 0
  %2712 = vmatpush1.bf16.msra.mxu0 0
  %2713 = vmatprep.subr.bf16.mxu0 0
  %2714 = vmatpush1.bf16.msra.mxu0 0
  %2715 = vmatprep.subr.bf16.mxu0 0
  %2716 = vmatpush1.bf16.msra.mxu0 0
  %2717 = vmatprep.subr.bf16.mxu0 0
  %2718 = vmatpush1.bf16.msra.mxu0 0
  %2719 = vmatprep.subr.bf16.mxu0 0
  %2720 = vmatpush1.bf16.msra.mxu0 0
  %2721 = vmatprep.subr.bf16.mxu0 0
  %2722 = vmatpush1.bf16.msra.mxu0 0
  %2723 = vmatprep.subr.bf16.mxu0 0
  %2724 = vmatpush1.bf16.msra.mxu0 0
  %2725 = vmatprep.subr.bf16.mxu0 0
  %2726 = vmatpush1.bf16.msra.mxu0 0
  %2727 = vmatprep.mubr.bf16.mxu0 0
  %2728 = vmatmul.mubr.bf16.gmra.mrb[0].mxu0 %v2642
  %v2729 = vpop.f32.mrb[0].mxu0
  %v2730 = vadd.f32 %v2646, %v2729
  %v2731 = vpop.f32.mrb[0].mxu0
  %v2732 = vpop.f32.mrb[0].mxu0
  %v2733 = vpop.f32.mrb[0].mxu0
  %2734 = vdwg.mxu0
  %2735 = vst [vmem:[%s5] sm:$0xff] %v2730
  // Predicated region
  $region22: #{forward.1} parent=0 // pred_check
    _
  $region23: #{forward.1} parent=0 // pred_check_branch
    %2737 = sbr.rel (0) target = $region25
  $region24: #{forward.1} parent=0 // pred_region
    _
  $region25: #{forward.1} parent=0 // pred_fallthru
    _
  // Predicated region
  $region26: #{forward.1} parent=0 // pred_check
    _
  $region27: #{forward.1} parent=0 // pred_check_branch
    %2739 = sbr.rel (0) target = $region29
  $region28: #{forward.1} parent=0 // pred_region
    _
  $region29: #{forward.1} parent=0 // pred_fallthru
    _

</llo_original>
